<compile_context>
chip_gen: v7x
topology: tpu7x:2x2x1
jax: 0.10.0
libtpu: 0.0.40
codegen_flags: <defaults>
</compile_context>

<pallas_src>
import jax
import jax.numpy as jnp
from jax import lax
from jax.experimental import pallas as pl
from jax.experimental.pallas import tpu as pltpu


def _round_up(x, m):
    return ((x + m - 1) // m) * m


def _cdiv(a, b):
    return -(-a // b)


# ----------------------------------------------------------------------------
# Fused kernel: conv (per-tap matmuls over shifted bf16 input) + tanh +
# piecewise max pooling + fused [Linear | cosine-vs-RelationMean] head, for a
# tile of N_TILE sentences per grid step.
# ----------------------------------------------------------------------------
def _pcnn_fused_kernel(x_ref, pos_ref, w_ref, b_ref, wr_ref, bout_ref,
                       feat_ref, scores_ref, dist_ref):
    n_tile, seq, e = x_ref.shape
    fs = w_ref.shape[0]
    f = w_ref.shape[2]
    l = seq - fs + 1
    c_pad = bout_ref.shape[1]

    # ---- convolution: for each tap k, shift the bf16 input by k rows along
    #      seq (zero tail) and accumulate a full-seq matmul in f32.  The
    #      [n_tile, seq, e] -> [n_tile*seq, e] reshape is free (seq is a
    #      multiple of the sublane packing); no f32 output copies are made. ---
    x = x_ref[...]                                            # [n_tile, seq, e]
    acc = jnp.dot(x.reshape(n_tile * seq, e), w_ref[0],
                  preferred_element_type=jnp.float32)         # [n_tile*seq, f]
    for k in range(1, fs):                                    # fs small, static
        xk = jnp.concatenate(
            [x[:, k:, :], jnp.zeros((n_tile, k, e), x.dtype)], axis=1)
        acc = acc + jnp.dot(xk.reshape(n_tile * seq, e), w_ref[k],
                            preferred_element_type=jnp.float32)
    # conv bias applied exactly once, then tanh; rows t >= L are garbage and
    # are masked out in the pooling below.
    h = jnp.tanh(acc + b_ref[...]).reshape(n_tile, seq, f)    # f32

    # ---- data-dependent piecewise max pooling over [0,p1], [p1,p2], [p2,L)
    #      (inclusive/overlapping at p1,p2, matching the PyTorch slicing),
    #      vectorized over the whole tile. ----
    t = lax.broadcasted_iota(jnp.int32, (n_tile, seq, 1), 1)
    pos = pos_ref[...]                                        # [n_tile, 1, 2]
    p1 = pos[:, :, 0:1]                                       # [n_tile, 1, 1]
    p2 = pos[:, :, 1:2]
    valid = t < l                                             # clamp to conv L
    neg = jnp.float32(-1e30)
    pool1 = jnp.max(jnp.where((t <= p1) & valid, h, neg), axis=1)   # [n_tile,f]
    pool2 = jnp.max(jnp.where((t >= p1) & (t <= p2) & valid, h, neg), axis=1)
    pool3 = jnp.max(jnp.where((t >= p2) & valid, h, neg), axis=1)

    # Segment-major feature layout; the PyTorch per-filter interleave is
    # folded into a host-side permutation of the downstream weights.
    feat = jnp.concatenate([pool1, pool2, pool3], axis=1)     # [n_tile, 3f]
    feat_ref[...] = feat

    # ---- fused head: one [3f, 2*c_pad] RHS -> scores | cosine numerators ----
    combined = jnp.dot(feat, wr_ref[...],
                       preferred_element_type=jnp.float32)    # [n_tile, 2c_pad]
    scores_ref[...] = combined[:, :c_pad] + bout_ref[...]
    inv_norm = lax.rsqrt(jnp.maximum(
        jnp.sum(feat * feat, axis=1, keepdims=True), jnp.float32(1e-16)))
    dist_ref[...] = combined[:, c_pad:] * inv_norm            # cosine (|x|>=1e-8)


# ----------------------------------------------------------------------------
# VMEM budget / tile selection (generation aware).
# ----------------------------------------------------------------------------
def _vmem_limit_bytes():
    cap = None
    try:
        cap = int(pltpu.get_tpu_info().vmem_capacity_bytes)
    except Exception:
        cap = None
    if not cap:
        cap = 64 * 1024 * 1024  # conservative: assume v7x-sized VMEM
    # leave ~35% headroom for compiler scratch / DMA descriptors
    return int(max(32 * 1024 * 1024, min(96 * 1024 * 1024, cap * 65 // 100)))


def _pick_n_tile(n, seq, e, f, in_itemsize, vmem_budget_bytes):
    """Sentences per grid step: prefer 128 MXU rows, stay inside the VMEM
    budget, and keep >= 2 grid steps (when N >= 16) so a 2nd TC is useful."""
    n8 = _round_up(max(n, 8), 8)
    per_sentence = (
        3 * seq * e * in_itemsize      # input block (x2 bufs) + 1 shifted copy
        + 5 * seq * f * 4              # live f32 conv / tanh / mask temps
        + 2 * (3 * f + 4 * 128) * 4)   # lane-dense output blocks (x2 bufs)
    fixed = 2 * 1024 * 1024            # weights + misc headroom
    cap = max(8, ((vmem_budget_bytes - fixed) // per_sentence) // 8 * 8)
    if n8 >= 16:
        want = min(128, _round_up(_cdiv(n8, 2), 8))
    else:
        want = n8
    return int(max(8, min(cap, want)))


def _pcnn_pallas(emb, pos12, w_taps, conv_b_row, wr_pad, bout_pad,
                 *, n_tile, vmem_limit):
    n_pad, seq, e = emb.shape
    fs, _, f = w_taps.shape
    c_pad = bout_pad.shape[1]
    return pl.pallas_call(
        _pcnn_fused_kernel,
        out_shape=(
            jax.ShapeDtypeStruct((n_pad, 3 * f), jnp.float32),
            jax.ShapeDtypeStruct((n_pad, c_pad), jnp.float32),
            jax.ShapeDtypeStruct((n_pad, c_pad), jnp.float32),
        ),
        grid=(n_pad // n_tile,),
        in_specs=[
            pl.BlockSpec((n_tile, seq, e), lambda i: (i, 0, 0)),     # embeddings
            pl.BlockSpec((n_tile, 1, 2), lambda i: (i, 0, 0)),       # pos1|pos2
            pl.BlockSpec((fs, e, f), lambda i: (0, 0, 0)),           # conv taps
            pl.BlockSpec((1, f), lambda i: (0, 0)),                  # conv bias
            pl.BlockSpec((3 * f, 2 * c_pad), lambda i: (0, 0)),      # [W_out|RelMean^T]
            pl.BlockSpec((1, c_pad), lambda i: (0, 0)),              # Linear bias
        ],
        out_specs=(
            pl.BlockSpec((n_tile, 3 * f), lambda i: (i, 0)),
            pl.BlockSpec((n_tile, c_pad), lambda i: (i, 0)),
            pl.BlockSpec((n_tile, c_pad), lambda i: (i, 0)),
        ),
        compiler_params=pltpu.CompilerParams(
            # sentence tiles are independent -> shard across TCs (v7x megacore)
            dimension_semantics=("parallel",),
            vmem_limit_bytes=vmem_limit,
        ),
    )(emb, pos12, w_taps, conv_b_row, wr_pad, bout_pad)


# ----------------------------------------------------------------------------
# One-time host-side parameter massaging for the kernel.
# ----------------------------------------------------------------------------
def prepare_pcnn_params(params, conv_dtype=jnp.float32):
    fs = params["filter_size"]
    f = params["num_filters"]
    c = params["classes"]
    c_pad = _round_up(c, 128)

    # conv weights as per-tap [E, F] matrices (PyTorch layout [F, 1, fs, E])
    w_taps = jnp.transpose(params["conv_w"][:, 0, :, :], (1, 2, 0)).astype(conv_dtype)
    conv_b_row = params["conv_b"].reshape(1, f).astype(jnp.float32)

    # Permutation mapping the kernel's segment-major feature layout onto the
    # PyTorch interleaved layout (torch.t(pool_all).resize(1,3F)):
    # segment-major index s*F + filt  <->  interleaved index filt*3 + s.
    j = jnp.arange(3 * f)
    perm = (j % f) * 3 + (j // f)

    wout_seg = params["out_w"][:, perm].T.astype(jnp.float32)     # [3F, C]
    out_b = params["out_b"].astype(jnp.float32)                   # [C]
    wout_pad = jnp.zeros((3 * f, c_pad), jnp.float32).at[:, :c].set(wout_seg)
    bout_pad = jnp.zeros((1, c_pad), jnp.float32).at[0, :c].set(out_b)

    rel = params["RelationMean"][:, perm]                         # [C, 3F] seg-major
    rel_norm = jnp.sqrt(jnp.sum(rel * rel, axis=1, keepdims=True))
    rel_n = rel / jnp.maximum(rel_norm, 1e-8)                     # CosineSimilarity eps
    reln_pad = jnp.zeros((3 * f, c_pad), jnp.float32).at[:, :c].set(rel_n.T)

    # fused head RHS: [3F, 2*c_pad] = [Linear W | normalized RelationMean^T]
    wr_pad = jnp.concatenate([wout_pad, reln_pad], axis=1)

    return dict(
        filter_size=fs, num_filters=f, classes=c, c_pad=c_pad,
        conv_dtype=conv_dtype,
        wordvec=params["wordvec"],
        PF1_embedding=params["PF1_embedding"],
        PF2_embedding=params["PF2_embedding"],
        w_taps=w_taps, conv_b_row=conv_b_row,
        wr_pad=wr_pad, bout_pad=bout_pad,
        wout_seg=wout_seg, out_b=out_b,
        rel_seg_n=rel_n,
    )


# ----------------------------------------------------------------------------
# Full forward pass (training path of textPCNN.forward unless if_eval=True)
# ----------------------------------------------------------------------------
def text_pcnn_forward(prep, tokens, pf1_idx, pf2_idx, pos1, pos2,
                      bag_labels, bag_size, superbag_size, if_eval=False):
    n = tokens.shape[0]
    f = prep["num_filters"]
    c = prep["classes"]
    fs = prep["filter_size"]

    # --- embedding lookups + concat (XLA glue) ---
    emb = jnp.concatenate(
        [prep["wordvec"][tokens],
         prep["PF1_embedding"][pf1_idx],
         prep["PF2_embedding"][pf2_idx]], axis=-1).astype(prep["conv_dtype"])
    seq, e = emb.shape[1], emb.shape[2]
    l = seq - fs + 1

    # clamp entity positions to the valid conv-output range (no-op for valid
    # data; avoids -1e30 sentinel features for degenerate positions)
    p1 = jnp.clip(pos1.astype(jnp.int32), 0, l - 1)
    p2 = jnp.clip(pos2.astype(jnp.int32), p1, l - 1)

    vmem_limit = _vmem_limit_bytes()
    n_tile = _pick_n_tile(n, seq, e, f,
                          jnp.dtype(prep["conv_dtype"]).itemsize, vmem_limit)
    n_pad = _round_up(max(n, n_tile), n_tile)
    if n_pad != n:
        emb = jnp.pad(emb, ((0, n_pad - n), (0, 0), (0, 0)))
        p1 = jnp.pad(p1, (0, n_pad - n))
        p2 = jnp.pad(p2, (0, n_pad - n))
    pos12 = jnp.stack([p1, p2], axis=-1).reshape(n_pad, 1, 2)

    feat_pad, scores_pad, dist_pad = _pcnn_pallas(
        emb, pos12, prep["w_taps"], prep["conv_b_row"],
        prep["wr_pad"], prep["bout_pad"], n_tile=n_tile, vmem_limit=vmem_limit)

    feat = feat_pad[:n]
    scores = scores_pad[:n, :c]
    if if_eval:
        return scores

    # --- sentence-level attention vs RelationMean (cosine already in kernel) ---
    att_norm1 = jax.nn.softmax(dist_pad[:n, :c], axis=1)        # [N, C]

    num_bags = n // bag_size
    att_b = att_norm1.reshape(num_bags, bag_size, c)
    fw = jnp.take_along_axis(att_b, bag_labels[:, None, None], axis=2)[..., 0]
    weight_all = jnp.sum(fw, axis=1, keepdims=True)
    fw = jnp.where(weight_all < 0.001,
                   jnp.full_like(fw, 1.0 / bag_size),
                   fw / weight_all)                             # [num_bags, bag_size]
    feat_b = feat.reshape(num_bags, bag_size, 3 * f)
    bag_feature = jnp.einsum("bs,bsf->bf", fw, feat_b)          # [num_bags, 3F]

    super_bag_labels = bag_labels[::superbag_size]

    # --- super-bag attention (row-wise cosine against RelationMean[label]) ---
    re_m_n = prep["rel_seg_n"][bag_labels]                      # [num_bags, 3F]
    bf_norm = jnp.sqrt(jnp.sum(bag_feature * bag_feature, axis=1, keepdims=True))
    bf_n = bag_feature / jnp.maximum(bf_norm, 1e-8)
    xAr = jnp.sum(bf_n * re_m_n, axis=1)                        # [num_bags]
    xAr = xAr.reshape(num_bags // superbag_size, superbag_size)
    norm_att = jax.nn.softmax(xAr, axis=1).reshape(num_bags, 1)
    tem = (bag_feature * norm_att).reshape(
        num_bags // superbag_size, superbag_size, 3 * f)
    SB_features = jnp.sum(tem, axis=1)                          # [num_superbags, 3F]

    # TODO(synk): nn.Dropout(p=0.5) applied as identity (inference behavior);
    # training-mode masking would need pltpu.prng_* with a fixed seed.
    # Tiny matmul -> plain XLA dot (a separate pallas_call is pure overhead).
    output = SB_features @ prep["wout_seg"] + prep["out_b"][None, :]
    return output, super_bag_labels, scores


# ----------------------------------------------------------------------------
# main
# ----------------------------------------------------------------------------
if __name__ == "__main__":
    # Small, self-consistent shapes (PF_embedding_dim == word_embedding_dim so
    # the conv kernel width matches the concatenated embedding width, as the
    # original module implicitly requires).  F=128 keeps outputs lane-dense.
    sequence_length = 32          # sentence length (and word vocab size here)
    word_embedding_dim = 32
    PF_embedding_dim = 32
    filter_size = 3
    num_filters = 128
    num_classes = 5
    superbag_size = 2
    bag_size = 2
    num_bags = 4
    N = num_bags * bag_size       # 8 sentences
    L = sequence_length - filter_size + 1
    CONV_DTYPE = jnp.bfloat16     # bf16 MXU operands (f32 accum); use float32
                                  # for bit-faithful PyTorch numerics.

    key = jax.random.PRNGKey(0)
    keys = jax.random.split(key, 12)

    params = {
        "filter_size": filter_size,
        "num_filters": num_filters,
        "classes": num_classes,
        "wordvec": 0.1 * jax.random.normal(
            keys[0], (sequence_length, word_embedding_dim), jnp.float32),
        "PF1_embedding": 0.1 * jax.random.normal(
            keys[1], (PF_embedding_dim, word_embedding_dim), jnp.float32),
        "PF2_embedding": 0.1 * jax.random.normal(
            keys[2], (PF_embedding_dim, word_embedding_dim), jnp.float32),
        # Conv2d(1, F, (fs, 3*wdim)) weight in PyTorch layout [F, 1, fs, emb]
        "conv_w": 0.1 * jax.random.normal(
            keys[3], (num_filters, 1, filter_size,
                      word_embedding_dim + 2 * PF_embedding_dim), jnp.float32),
        "conv_b": 0.1 * jax.random.normal(keys[4], (num_filters,), jnp.float32),
        # Linear(3F -> classes), PyTorch layout [C, 3F] (interleaved features)
        "out_w": 0.1 * jax.random.normal(
            keys[5], (num_classes, 3 * num_filters), jnp.float32),
        "out_b": 0.1 * jax.random.normal(keys[6], (num_classes,), jnp.float32),
        "RelationMean": jax.random.normal(
            keys[7], (num_classes, 3 * num_filters), jnp.float32),
    }

    # synthetic "bags": token ids, position-feature ids, entity positions, labels
    tokens = jax.random.randint(keys[8], (N, sequence_length), 0,
                                sequence_length, jnp.int32)
    pf1_idx = jax.random.randint(keys[9], (N, sequence_length), 0,
                                 PF_embedding_dim, jnp.int32)
    pf2_idx = jax.random.randint(keys[10], (N, sequence_length), 0,
                                 PF_embedding_dim, jnp.int32)
    pos1 = jnp.array([2, 3, 1, 4, 5, 0, 3, 2], jnp.int32)
    pos2 = jnp.array([7, 10, 5, 9, 12, 6, 8, 11], jnp.int32)
    bag_labels = jnp.array([1, 3, 0, 2], jnp.int32)

    prep = prepare_pcnn_params(params, conv_dtype=CONV_DTYPE)

    output, super_bag_labels, scores = text_pcnn_forward(
        prep, tokens, pf1_idx, pf2_idx, pos1, pos2,
        bag_labels, bag_size, superbag_size, if_eval=False)

    jax.block_until_ready(output)
    jax.block_until_ready(scores)

    # ---- lightweight correctness check: scores vs an unfold-based jnp reference
    emb_ref = jnp.concatenate(
        [params["wordvec"][tokens], params["PF1_embedding"][pf1_idx],
         params["PF2_embedding"][pf2_idx]], axis=-1)
    x_unf = jnp.concatenate([emb_ref[:, k:k + L, :] for k in range(filter_size)],
                            axis=-1)
    w_mat = params["conv_w"].reshape(num_filters, -1).T
    conv_ref = jnp.einsum("nlk,kf->nlf",
                          x_unf.astype(CONV_DTYPE), w_mat.astype(CONV_DTYPE),
                          preferred_element_type=jnp.float32) + params["conv_b"]
    h_ref = jnp.tanh(conv_ref)
    t_ref = jnp.arange(L)[None, :, None]
    p1b, p2b = pos1[:, None, None], pos2[:, None, None]
    neg = jnp.float32(-1e30)
    pool1 = jnp.max(jnp.where(t_ref <= p1b, h_ref, neg), axis=1)
    pool2 = jnp.max(jnp.where((t_ref >= p1b) & (t_ref <= p2b), h_ref, neg), axis=1)
    pool3 = jnp.max(jnp.where(t_ref >= p2b, h_ref, neg), axis=1)
    feat_ref = jnp.concatenate([pool1, pool2, pool3], axis=1)          # seg-major
    scores_ref = feat_ref @ prep["wout_seg"] + params["out_b"]
    assert bool(jnp.allclose(scores, scores_ref, atol=5e-3)), "scores mismatch"

    assert output.shape == (num_bags // superbag_size, num_classes)
    assert scores.shape == (N, num_classes)
    assert super_bag_labels.shape == (num_bags // superbag_size,)
    assert bool(jnp.all(jnp.isfinite(output)))
    assert bool(jnp.all(jnp.isfinite(scores)))

    print("KERNEL_OK")
</pallas_src>

<mosaic_0001>
module attributes {stable_mosaic.version = 11 : i64} {
  func.func @_pcnn_fused_kernel(%arg0: i32, %arg1: memref<8x32x96xbf16, #tpu.memory_space<vmem>>, %arg2: memref<8x1x2xi32, #tpu.memory_space<vmem>>, %arg3: memref<3x96x128xbf16, #tpu.memory_space<vmem>>, %arg4: memref<1x128xf32, #tpu.memory_space<vmem>>, %arg5: memref<384x256xf32, #tpu.memory_space<vmem>>, %arg6: memref<1x128xf32, #tpu.memory_space<vmem>>, %arg7: memref<8x384xf32, #tpu.memory_space<vmem>>, %arg8: memref<8x128xf32, #tpu.memory_space<vmem>>, %arg9: memref<8x128xf32, #tpu.memory_space<vmem>>) attributes {dimension_semantics = [#tpu.dimension_semantics<parallel>], iteration_bounds = array<i64: 1>, scalar_prefetch = 0 : i64, scratch_operands = 0 : i64, tpu.core_type = #tpu.core_type<tc>, window_params = [{transform_indices = @transform_0, window_bounds = array<i64: 8, 32, 96>}, {transform_indices = @transform_1, window_bounds = array<i64: 8, 1, 2>}, {pipeline_mode = #tpu.pipeline_mode<synchronous>, transform_indices = @transform_2, window_bounds = array<i64: 3, 96, 128>}, {pipeline_mode = #tpu.pipeline_mode<synchronous>, transform_indices = @transform_3, window_bounds = array<i64: 1, 128>}, {pipeline_mode = #tpu.pipeline_mode<synchronous>, transform_indices = @transform_4, window_bounds = array<i64: 384, 256>}, {pipeline_mode = #tpu.pipeline_mode<synchronous>, transform_indices = @transform_5, window_bounds = array<i64: 1, 128>}, {transform_indices = @transform_6, window_bounds = array<i64: 8, 384>}, {transform_indices = @transform_7, window_bounds = array<i64: 8, 128>}, {transform_indices = @transform_8, window_bounds = array<i64: 8, 128>}]} {
    %c0 = arith.constant 0 : index
    %c0_0 = arith.constant 0 : index
    %c0_1 = arith.constant 0 : index
    %0 = vector.load %arg1[%c0, %c0_0, %c0_1] : memref<8x32x96xbf16, #tpu.memory_space<vmem>>, vector<8x32x96xbf16>
    %1 = vector.shape_cast %0 : vector<8x32x96xbf16> to vector<256x96xbf16>
    %c0_2 = arith.constant 0 : index
    %c0_3 = arith.constant 0 : index
    %c0_4 = arith.constant 0 : index
    %2 = vector.load %arg3[%c0_2, %c0_3, %c0_4] : memref<3x96x128xbf16, #tpu.memory_space<vmem>>, vector<1x96x128xbf16>
    %3 = vector.shape_cast %2 : vector<1x96x128xbf16> to vector<96x128xbf16>
    %cst = arith.constant dense<0.000000e+00> : vector<256x128xf32>
    %4 = tpu.matmul %1, %3, %cst {dimension_numbers = #tpu.dot_dimension_numbers<[1], [0], [0], [1], [0, 0, 1, 1], [], []>} : vector<256x96xbf16>, vector<96x128xbf16>, vector<256x128xf32> -> vector<256x128xf32>
    %5 = vector.extract_strided_slice %0 {offsets = [0, 1, 0], sizes = [8, 31, 96], strides = [1, 1, 1]} : vector<8x32x96xbf16> to vector<8x31x96xbf16>
    %cst_5 = arith.constant 0.000000e+00 : bf16
    %6 = vector.broadcast %cst_5 : bf16 to vector<8x1x96xbf16>
    %7 = tpu.concatenate %5, %6 in 1 : vector<8x31x96xbf16>, vector<8x1x96xbf16> -> vector<8x32x96xbf16>
    %8 = vector.shape_cast %7 : vector<8x32x96xbf16> to vector<256x96xbf16>
    %c1 = arith.constant 1 : index
    %c0_6 = arith.constant 0 : index
    %c0_7 = arith.constant 0 : index
    %9 = vector.load %arg3[%c1, %c0_6, %c0_7] : memref<3x96x128xbf16, #tpu.memory_space<vmem>>, vector<1x96x128xbf16>
    %10 = vector.shape_cast %9 : vector<1x96x128xbf16> to vector<96x128xbf16>
    %cst_8 = arith.constant dense<0.000000e+00> : vector<256x128xf32>
    %11 = tpu.matmul %8, %10, %cst_8 {dimension_numbers = #tpu.dot_dimension_numbers<[1], [0], [0], [1], [0, 0, 1, 1], [], []>} : vector<256x96xbf16>, vector<96x128xbf16>, vector<256x128xf32> -> vector<256x128xf32>
    %12 = arith.addf %4, %11 : vector<256x128xf32>
    %13 = vector.extract_strided_slice %0 {offsets = [0, 2, 0], sizes = [8, 30, 96], strides = [1, 1, 1]} : vector<8x32x96xbf16> to vector<8x30x96xbf16>
    %cst_9 = arith.constant 0.000000e+00 : bf16
    %14 = vector.broadcast %cst_9 : bf16 to vector<8x2x96xbf16>
    %15 = tpu.concatenate %13, %14 in 1 : vector<8x30x96xbf16>, vector<8x2x96xbf16> -> vector<8x32x96xbf16>
    %16 = vector.shape_cast %15 : vector<8x32x96xbf16> to vector<256x96xbf16>
    %c2 = arith.constant 2 : index
    %c0_10 = arith.constant 0 : index
    %c0_11 = arith.constant 0 : index
    %17 = vector.load %arg3[%c2, %c0_10, %c0_11] : memref<3x96x128xbf16, #tpu.memory_space<vmem>>, vector<1x96x128xbf16>
    %18 = vector.shape_cast %17 : vector<1x96x128xbf16> to vector<96x128xbf16>
    %cst_12 = arith.constant dense<0.000000e+00> : vector<256x128xf32>
    %19 = tpu.matmul %16, %18, %cst_12 {dimension_numbers = #tpu.dot_dimension_numbers<[1], [0], [0], [1], [0, 0, 1, 1], [], []>} : vector<256x96xbf16>, vector<96x128xbf16>, vector<256x128xf32> -> vector<256x128xf32>
    %20 = arith.addf %12, %19 : vector<256x128xf32>
    %c0_13 = arith.constant 0 : index
    %c0_14 = arith.constant 0 : index
    %21 = vector.load %arg4[%c0_13, %c0_14] : memref<1x128xf32, #tpu.memory_space<vmem>>, vector<1x128xf32>
    %22 = vector.broadcast %21 : vector<1x128xf32> to vector<256x128xf32>
    %23 = arith.addf %20, %22 : vector<256x128xf32>
    %24 = math.tanh %23 : vector<256x128xf32>
    %25 = vector.shape_cast %24 : vector<256x128xf32> to vector<8x32x128xf32>
    %26 = tpu.iota {dimensions = array<i32: 1>} : vector<8x32x1xi32>
    %c0_15 = arith.constant 0 : index
    %c0_16 = arith.constant 0 : index
    %c0_17 = arith.constant 0 : index
    %27 = vector.load %arg2[%c0_15, %c0_16, %c0_17] : memref<8x1x2xi32, #tpu.memory_space<vmem>>, vector<8x1x2xi32>
    %28 = vector.extract_strided_slice %27 {offsets = [0, 0, 0], sizes = [8, 1, 1], strides = [1, 1, 1]} : vector<8x1x2xi32> to vector<8x1x1xi32>
    %29 = vector.extract_strided_slice %27 {offsets = [0, 0, 1], sizes = [8, 1, 1], strides = [1, 1, 1]} : vector<8x1x2xi32> to vector<8x1x1xi32>
    %c30_i32 = arith.constant 30 : i32
    %30 = vector.broadcast %c30_i32 : i32 to vector<8x32x1xi32>
    %31 = arith.cmpi slt, %26, %30 : vector<8x32x1xi32>
    %32 = vector.broadcast %28 : vector<8x1x1xi32> to vector<8x32x1xi32>
    %33 = arith.cmpi sle, %26, %32 : vector<8x32x1xi32>
    %34 = arith.andi %33, %31 : vector<8x32x1xi1>
    %cst_18 = arith.constant -1.000000e+30 : f32
    %35 = vector.shape_cast %34 : vector<8x32x1xi1> to vector<8x32x1xi1>
    %36 = vector.broadcast %35 : vector<8x32x1xi1> to vector<8x32x128xi1>
    %37 = vector.broadcast %cst_18 : f32 to vector<8x32x128xf32>
    %38 = arith.select %36, %25, %37 : vector<8x32x128xi1>, vector<8x32x128xf32>
    %cst_19 = arith.constant dense<0xFF800000> : vector<8x128xf32>
    %39 = vector.multi_reduction <maximumf>, %38, %cst_19 [1] : vector<8x32x128xf32> to vector<8x128xf32>
    %40 = vector.broadcast %28 : vector<8x1x1xi32> to vector<8x32x1xi32>
    %41 = arith.cmpi sge, %26, %40 : vector<8x32x1xi32>
    %42 = vector.broadcast %29 : vector<8x1x1xi32> to vector<8x32x1xi32>
    %43 = arith.cmpi sle, %26, %42 : vector<8x32x1xi32>
    %44 = arith.andi %41, %43 : vector<8x32x1xi1>
    %45 = arith.andi %44, %31 : vector<8x32x1xi1>
    %cst_20 = arith.constant -1.000000e+30 : f32
    %46 = vector.shape_cast %45 : vector<8x32x1xi1> to vector<8x32x1xi1>
    %47 = vector.broadcast %46 : vector<8x32x1xi1> to vector<8x32x128xi1>
    %48 = vector.broadcast %cst_20 : f32 to vector<8x32x128xf32>
    %49 = arith.select %47, %25, %48 : vector<8x32x128xi1>, vector<8x32x128xf32>
    %cst_21 = arith.constant dense<0xFF800000> : vector<8x128xf32>
    %50 = vector.multi_reduction <maximumf>, %49, %cst_21 [1] : vector<8x32x128xf32> to vector<8x128xf32>
    %51 = vector.broadcast %29 : vector<8x1x1xi32> to vector<8x32x1xi32>
    %52 = arith.cmpi sge, %26, %51 : vector<8x32x1xi32>
    %53 = arith.andi %52, %31 : vector<8x32x1xi1>
    %cst_22 = arith.constant -1.000000e+30 : f32
    %54 = vector.shape_cast %53 : vector<8x32x1xi1> to vector<8x32x1xi1>
    %55 = vector.broadcast %54 : vector<8x32x1xi1> to vector<8x32x128xi1>
    %56 = vector.broadcast %cst_22 : f32 to vector<8x32x128xf32>
    %57 = arith.select %55, %25, %56 : vector<8x32x128xi1>, vector<8x32x128xf32>
    %cst_23 = arith.constant dense<0xFF800000> : vector<8x128xf32>
    %58 = vector.multi_reduction <maximumf>, %57, %cst_23 [1] : vector<8x32x128xf32> to vector<8x128xf32>
    %59 = tpu.concatenate %39, %50, %58 in 1 : vector<8x128xf32>, vector<8x128xf32>, vector<8x128xf32> -> vector<8x384xf32>
    %c0_24 = arith.constant 0 : index
    %c0_25 = arith.constant 0 : index
    %60 = vector.load %arg7[%c0_24, %c0_25] : memref<8x384xf32, #tpu.memory_space<vmem>>, vector<8x384xf32>
    tpu.vector_store %arg7[%c0_24, %c0_25], %59 {strides = array<i32>} : memref<8x384xf32, #tpu.memory_space<vmem>>, vector<8x384xf32>,
    %c0_26 = arith.constant 0 : index
    %c0_27 = arith.constant 0 : index
    %61 = vector.load %arg5[%c0_26, %c0_27] : memref<384x256xf32, #tpu.memory_space<vmem>>, vector<384x256xf32>
    %cst_28 = arith.constant dense<0.000000e+00> : vector<8x256xf32>
    %62 = tpu.matmul %59, %61, %cst_28 {dimension_numbers = #tpu.dot_dimension_numbers<[1], [0], [0], [1], [0, 0, 1, 1], [], []>} : vector<8x384xf32>, vector<384x256xf32>, vector<8x256xf32> -> vector<8x256xf32>
    %63 = vector.extract_strided_slice %62 {offsets = [0, 0], sizes = [8, 128], strides = [1, 1]} : vector<8x256xf32> to vector<8x128xf32>
    %c0_29 = arith.constant 0 : index
    %c0_30 = arith.constant 0 : index
    %64 = vector.load %arg6[%c0_29, %c0_30] : memref<1x128xf32, #tpu.memory_space<vmem>>, vector<1x128xf32>
    %65 = vector.broadcast %64 : vector<1x128xf32> to vector<8x128xf32>
    %66 = arith.addf %63, %65 : vector<8x128xf32>
    %c0_31 = arith.constant 0 : index
    %c0_32 = arith.constant 0 : index
    %67 = vector.load %arg8[%c0_31, %c0_32] : memref<8x128xf32, #tpu.memory_space<vmem>>, vector<8x128xf32>
    tpu.vector_store %arg8[%c0_31, %c0_32], %66 {strides = array<i32>} : memref<8x128xf32, #tpu.memory_space<vmem>>, vector<8x128xf32>,
    %68 = arith.mulf %59, %59 : vector<8x384xf32>
    %cst_33 = arith.constant dense<0.000000e+00> : vector<8xf32>
    %69 = vector.multi_reduction <add>, %68, %cst_33 [1] : vector<8x384xf32> to vector<8xf32>
    %70 = vector.shape_cast %69 : vector<8xf32> to vector<8x1xf32>
    %cst_34 = arith.constant 1.000000e-16 : f32
    %71 = vector.broadcast %cst_34 : f32 to vector<8x1xf32>
    %72 = arith.maximumf %70, %71 : vector<8x1xf32>
    %73 = math.rsqrt %72 : vector<8x1xf32>
    %74 = vector.extract_strided_slice %62 {offsets = [0, 128], sizes = [8, 128], strides = [1, 1]} : vector<8x256xf32> to vector<8x128xf32>
    %75 = vector.broadcast %73 : vector<8x1xf32> to vector<8x128xf32>
    %76 = arith.mulf %74, %75 : vector<8x128xf32>
    %c0_35 = arith.constant 0 : index
    %c0_36 = arith.constant 0 : index
    %77 = vector.load %arg9[%c0_35, %c0_36] : memref<8x128xf32, #tpu.memory_space<vmem>>, vector<8x128xf32>
    tpu.vector_store %arg9[%c0_35, %c0_36], %76 {strides = array<i32>} : memref<8x128xf32, #tpu.memory_space<vmem>>, vector<8x128xf32>,
    return
  }
  func.func @transform_0(%arg0: i32) -> (i32, i32, i32) {
    %c0_i32 = arith.constant 0 : i32
    %c0_i32_0 = arith.constant 0 : i32
    %c0_i32_1 = arith.constant 0 : i32
    return %arg0, %c0_i32, %c0_i32_0 : i32, i32, i32
  }
  func.func @transform_1(%arg0: i32) -> (i32, i32, i32) {
    %c0_i32 = arith.constant 0 : i32
    %c0_i32_0 = arith.constant 0 : i32
    %c0_i32_1 = arith.constant 0 : i32
    return %arg0, %c0_i32, %c0_i32_0 : i32, i32, i32
  }
  func.func @transform_2(%arg0: i32) -> (i32, i32, i32) {
    %c0_i32 = arith.constant 0 : i32
    %c0_i32_0 = arith.constant 0 : i32
    %c0_i32_1 = arith.constant 0 : i32
    %c0_i32_2 = arith.constant 0 : i32
    return %c0_i32, %c0_i32_0, %c0_i32_1 : i32, i32, i32
  }
  func.func @transform_3(%arg0: i32) -> (i32, i32) {
    %c0_i32 = arith.constant 0 : i32
    %c0_i32_0 = arith.constant 0 : i32
    %c0_i32_1 = arith.constant 0 : i32
    return %c0_i32, %c0_i32_0 : i32, i32
  }
  func.func @transform_4(%arg0: i32) -> (i32, i32) {
    %c0_i32 = arith.constant 0 : i32
    %c0_i32_0 = arith.constant 0 : i32
    %c0_i32_1 = arith.constant 0 : i32
    return %c0_i32, %c0_i32_0 : i32, i32
  }
  func.func @transform_5(%arg0: i32) -> (i32, i32) {
    %c0_i32 = arith.constant 0 : i32
    %c0_i32_0 = arith.constant 0 : i32
    %c0_i32_1 = arith.constant 0 : i32
    return %c0_i32, %c0_i32_0 : i32, i32
  }
  func.func @transform_6(%arg0: i32) -> (i32, i32) {
    %c0_i32 = arith.constant 0 : i32
    %c0_i32_0 = arith.constant 0 : i32
    return %arg0, %c0_i32 : i32, i32
  }
  func.func @transform_7(%arg0: i32) -> (i32, i32) {
    %c0_i32 = arith.constant 0 : i32
    %c0_i32_0 = arith.constant 0 : i32
    return %arg0, %c0_i32 : i32, i32
  }
  func.func @transform_8(%arg0: i32) -> (i32, i32) {
    %c0_i32 = arith.constant 0 : i32
    %c0_i32_0 = arith.constant 0 : i32
    return %arg0, %c0_i32 : i32, i32
  }
}

</mosaic_0001>

<llo_original>
// kernel: tpu_custom_call.1
$region0: #{tpu_custom_call.1}
  #allocation0 [shape = 'u32[]', space=smem, size = 0x4, offset = 0x4, fixed_abs, tag = 'smem constant byte address 0x4 - core index']
  #allocation1 [shape = 'u32[144,128]{1,0:T(1,128)}', space=vmem, size = 0x12000, scoped, tag = 'internal scratch']
  %s0 = inlined_call_operand.hbm [shape: bf16[8,32,96], index: 0, kind: input, shape index: {}]
  %s1 = inlined_call_operand.vmem [shape: s32[8,1,2], index: 1, kind: input, shape index: {}]
  %s2 = inlined_call_operand.hbm [shape: bf16[3,96,128], index: 2, kind: input, shape index: {}]
  %s3 = inlined_call_operand.vmem [shape: f32[1,128], index: 3, kind: input, shape index: {}]
  %s4 = inlined_call_operand.hbm [shape: f32[384,256], index: 4, kind: input, shape index: {}]
  %s5 = inlined_call_operand.vmem [shape: f32[1,128], index: 5, kind: input, shape index: {}]
  %s6 = inlined_call_operand.hbm [shape: f32[8,384], index: 6, kind: output, shape index: {0}]
  %s7 = inlined_call_operand.hbm [shape: f32[8,128], index: 7, kind: output, shape index: {1}]
  %s8 = inlined_call_operand.hbm [shape: f32[8,128], index: 8, kind: output, shape index: {2}]
  %9 = xla_tuple %s6, %s7, %s8
  %s10 = sld [smem:[#allocation0]]
  $region62: #{tpu_custom_call.1} parent=0
    _
  %s12 = ssub.s32 1, %s10
  %s13 = scalar_select 0, %s12, %s10
  $region1: #{tpu_custom_call.1} parent=0
    #allocation2 [shape = 'u8[65536]{0}', space=vmem, size = 0x10000, scoped, tag = 'input window, operand 0, single buffered']
    #allocation3 [shape = 's32[1]{0}', space=sflag, size = 0x4, scoped, tag = 'scoped memory for tpu_custom_call.1']
    #allocation4 [shape = 's32[1]{0}', space=sflag, size = 0x4, scoped, tag = 'scoped memory for tpu_custom_call.1']
    #allocation5 [shape = 'u8[73728]{0}', space=vmem, size = 0x12000, scoped, tag = 'input window, operand 2, single buffered']
    #allocation6 [shape = 's32[1]{0}', space=sflag, size = 0x4, scoped, tag = 'scoped memory for tpu_custom_call.1']
    #allocation7 [shape = 'u8[393216]{0}', space=vmem, size = 0x60000, scoped, tag = 'input window, operand 4, single buffered']
    #allocation8 [shape = 'u8[12288]{0}', space=vmem, size = 0x3000, scoped, tag = 'output window, operand 0, single buffered']
    #allocation9 [shape = 'u8[4096]{0}', space=vmem, size = 0x1000, scoped, tag = 'output window, operand 1, single buffered']
    #allocation10 [shape = 's32[1]{0}', space=sflag, size = 0x4, scoped, tag = 'scoped memory for tpu_custom_call.1']
    #allocation11 [shape = 'u8[4096]{0}', space=vmem, size = 0x1000, scoped, tag = 'output window, operand 2, single buffered']
    %14 = vsyncpa [#allocation3], 0
    %15 = vsyncpa [#allocation6], 0
    %16 = vsyncpa [#allocation4], 0
    %17 = vsyncpa [#allocation10], 0
    // Predicated region
    $region2: #{tpu_custom_call.1} parent=1 // pred_check
      _
    $region3: #{tpu_custom_call.1} parent=1 // pred_check_branch
      %19 = sbr.rel (0) target = $region5
    $region4: #{tpu_custom_call.1} parent=1 // pred_region
      %s21 = ssub.s32 2048, 2048
      %22 = vsyncadd [#allocation3], %s21
      %s23 = sshll.u32 [#allocation2], 4
      %s24 = int_to_ptr.vmem [resolvable:$true] %s23
      %29 = dma.hbm_to_vmem [thread:$0]  %s0, 2048, %s24, [#allocation3], 64, 64, 4
    $region5: #{tpu_custom_call.1} parent=1 // pred_fallthru
      _
    // Predicated region
    $region6: #{tpu_custom_call.1} parent=1 // pred_check
      _
    $region7: #{tpu_custom_call.1} parent=1 // pred_check_branch
      %31 = sbr.rel (0) target = $region9
    $region8: #{tpu_custom_call.1} parent=1 // pred_region
      _
    $region9: #{tpu_custom_call.1} parent=1 // pred_fallthru
      _
    // Predicated region
    $region10: #{tpu_custom_call.1} parent=1 // pred_check
      _
    $region11: #{tpu_custom_call.1} parent=1 // pred_check_branch
      %33 = sbr.rel (0) target = $region13
    $region12: #{tpu_custom_call.1} parent=1 // pred_region
      %s35 = ssub.s32 2304, 2304
      %36 = vsyncadd [#allocation6], %s35
      %s37 = sshll.u32 [#allocation5], 4
      %s38 = int_to_ptr.vmem [resolvable:$true] %s37
      %43 = dma.hbm_to_vmem [thread:$0]  %s2, 2304, %s38, [#allocation6], 64, 64, 4
    $region13: #{tpu_custom_call.1} parent=1 // pred_fallthru
      _
    // Predicated region
    $region14: #{tpu_custom_call.1} parent=1 // pred_check
      _
    $region15: #{tpu_custom_call.1} parent=1 // pred_check_branch
      %45 = sbr.rel (0) target = $region17
    $region16: #{tpu_custom_call.1} parent=1 // pred_region
      _
    $region17: #{tpu_custom_call.1} parent=1 // pred_fallthru
      _
    // Predicated region
    $region18: #{tpu_custom_call.1} parent=1 // pred_check
      _
    $region19: #{tpu_custom_call.1} parent=1 // pred_check_branch
      %47 = sbr.rel (0) target = $region21
    $region20: #{tpu_custom_call.1} parent=1 // pred_region
      %s49 = ssub.s32 12288, 12288
      %50 = vsyncadd [#allocation6], %s49
      %s51 = sshll.u32 [#allocation7], 4
      %s52 = int_to_ptr.vmem [resolvable:$true] %s51
      %57 = dma.hbm_to_vmem [thread:$0]  %s4, 12288, %s52, [#allocation6], 256, 256, 16
    $region21: #{tpu_custom_call.1} parent=1 // pred_fallthru
      _
    // Predicated region
    $region22: #{tpu_custom_call.1} parent=1 // pred_check
      _
    $region23: #{tpu_custom_call.1} parent=1 // pred_check_branch
      %59 = sbr.rel (0) target = $region25
    $region24: #{tpu_custom_call.1} parent=1 // pred_region
      _
    $region25: #{tpu_custom_call.1} parent=1 // pred_fallthru
      _
    // Predicated region
    $region26: #{tpu_custom_call.1} parent=1 // pred_check
      _
    $region27: #{tpu_custom_call.1} parent=1 // pred_check_branch
      %61 = sbr.rel (0) target = $region29
    $region28: #{tpu_custom_call.1} parent=1 // pred_region
      %62 = dma.done [#allocation3], 2048
    $region29: #{tpu_custom_call.1} parent=1 // pred_fallthru
      _
    // Predicated region
    $region30: #{tpu_custom_call.1} parent=1 // pred_check
      _
    $region31: #{tpu_custom_call.1} parent=1 // pred_check_branch
      %64 = sbr.rel (0) target = $region33
    $region32: #{tpu_custom_call.1} parent=1 // pred_region
      %65 = dma.done [#allocation6], 2304
    $region33: #{tpu_custom_call.1} parent=1 // pred_fallthru
      _
    // Predicated region
    $region34: #{tpu_custom_call.1} parent=1 // pred_check
      _
    $region35: #{tpu_custom_call.1} parent=1 // pred_check_branch
      %67 = sbr.rel (0) target = $region37
    $region36: #{tpu_custom_call.1} parent=1 // pred_region
      %68 = dma.done [#allocation6], 12288
    $region37: #{tpu_custom_call.1} parent=1 // pred_fallthru
      _
    %v70 = vld [vmem:[#allocation2] sm:$0xf]
    %v71 = vld [vmem:[#allocation2 + $0x4] sm:$0xf]
    %v72 = vld [vmem:[#allocation2 + $0x8] sm:$0xf]
    %v73 = vld [vmem:[#allocation2 + $0xc] sm:$0xf]
    %v74 = vld [vmem:[#allocation2 + $0x10] sm:$0xf]
    %v75 = vld [vmem:[#allocation2 + $0x14] sm:$0xf]
    %v76 = vld [vmem:[#allocation2 + $0x18] sm:$0xf]
    %v77 = vld [vmem:[#allocation2 + $0x1c] sm:$0xf]
    %v78 = vld [vmem:[#allocation2 + $0x20] sm:$0xf]
    %v79 = vld [vmem:[#allocation2 + $0x24] sm:$0xf]
    %v80 = vld [vmem:[#allocation2 + $0x28] sm:$0xf]
    %v81 = vld [vmem:[#allocation2 + $0x2c] sm:$0xf]
    %v82 = vld [vmem:[#allocation2 + $0x30] sm:$0xf]
    %v83 = vld [vmem:[#allocation2 + $0x34] sm:$0xf]
    %v84 = vld [vmem:[#allocation2 + $0x38] sm:$0xf]
    %v85 = vld [vmem:[#allocation2 + $0x3c] sm:$0xf]
    %v86 = vld [vmem:[#allocation2 + $0x40] sm:$0xf]
    %v87 = vld [vmem:[#allocation2 + $0x44] sm:$0xf]
    %v88 = vld [vmem:[#allocation2 + $0x48] sm:$0xf]
    %v89 = vld [vmem:[#allocation2 + $0x4c] sm:$0xf]
    %v90 = vld [vmem:[#allocation2 + $0x50] sm:$0xf]
    %v91 = vld [vmem:[#allocation2 + $0x54] sm:$0xf]
    %v92 = vld [vmem:[#allocation2 + $0x58] sm:$0xf]
    %v93 = vld [vmem:[#allocation2 + $0x5c] sm:$0xf]
    %v94 = vld [vmem:[#allocation2 + $0x60] sm:$0xf]
    %v95 = vld [vmem:[#allocation2 + $0x64] sm:$0xf]
    %v96 = vld [vmem:[#allocation2 + $0x68] sm:$0xf]
    %v97 = vld [vmem:[#allocation2 + $0x6c] sm:$0xf]
    %v98 = vld [vmem:[#allocation2 + $0x70] sm:$0xf]
    %v99 = vld [vmem:[#allocation2 + $0x74] sm:$0xf]
    %v100 = vld [vmem:[#allocation2 + $0x78] sm:$0xf]
    %v101 = vld [vmem:[#allocation2 + $0x7c] sm:$0xf]
    %v102 = vld [vmem:[#allocation5] sm:$0xf]
    %v103 = vld [vmem:[#allocation5 + $0x4] sm:$0xf]
    %v104 = vld [vmem:[#allocation5 + $0x8] sm:$0xf]
    %v105 = vld [vmem:[#allocation5 + $0xc] sm:$0xf]
    %v106 = vld [vmem:[#allocation5 + $0x10] sm:$0xf]
    %v107 = vld [vmem:[#allocation5 + $0x14] sm:$0xf]
    %v108 = vld [vmem:[#allocation5 + $0x18] sm:$0xf]
    %v109 = vld [vmem:[#allocation5 + $0x1c] sm:$0xf]
    %v110 = vld [vmem:[#allocation5 + $0x20] sm:$0xf]
    %v111 = vld [vmem:[#allocation5 + $0x24] sm:$0xf]
    %v112 = vld [vmem:[#allocation5 + $0x28] sm:$0xf]
    %v113 = vld [vmem:[#allocation5 + $0x2c] sm:$0xf]
    %v146 = vunpack.c.l.b16 %v70
    %v147 = vunpack.c.l.b16 %v71
    %v148 = vunpack.c.l.b16 %v72
    %v149 = vunpack.c.l.b16 %v73
    %v150 = vunpack.c.l.b16 %v74
    %v151 = vunpack.c.l.b16 %v75
    %v152 = vunpack.c.l.b16 %v76
    %v153 = vunpack.c.l.b16 %v77
    %v154 = vunpack.c.l.b16 %v78
    %v155 = vunpack.c.l.b16 %v79
    %v156 = vunpack.c.l.b16 %v80
    %v157 = vunpack.c.l.b16 %v81
    %v158 = vunpack.c.l.b16 %v82
    %v159 = vunpack.c.l.b16 %v83
    %v160 = vunpack.c.l.b16 %v84
    %v161 = vunpack.c.l.b16 %v85
    %v162 = vunpack.c.l.b16 %v86
    %v163 = vunpack.c.l.b16 %v87
    %v164 = vunpack.c.l.b16 %v88
    %v165 = vunpack.c.l.b16 %v89
    %v166 = vunpack.c.l.b16 %v90
    %v167 = vunpack.c.l.b16 %v91
    %v168 = vunpack.c.l.b16 %v92
    %v169 = vunpack.c.l.b16 %v93
    %v170 = vunpack.c.l.b16 %v94
    %v171 = vunpack.c.l.b16 %v95
    %v172 = vunpack.c.l.b16 %v96
    %v173 = vunpack.c.l.b16 %v97
    %v174 = vunpack.c.l.b16 %v98
    %v175 = vunpack.c.l.b16 %v99
    %v176 = vunpack.c.l.b16 %v100
    %v177 = vunpack.c.l.b16 %v101
    %v178 = vpack.c.b16 %v147, %v146
    %v179 = vpack.c.b16 %v149, %v148
    %v180 = vpack.c.b16 %v151, %v150
    %v181 = vpack.c.b16 %v153, %v152
    %v182 = vpack.c.b16 %v155, %v154
    %v183 = vpack.c.b16 %v157, %v156
    %v184 = vpack.c.b16 %v159, %v158
    %v185 = vpack.c.b16 %v161, %v160
    %v186 = vpack.c.b16 %v163, %v162
    %v187 = vpack.c.b16 %v165, %v164
    %v188 = vpack.c.b16 %v167, %v166
    %v189 = vpack.c.b16 %v169, %v168
    %v190 = vpack.c.b16 %v171, %v170
    %v191 = vpack.c.b16 %v173, %v172
    %v192 = vpack.c.b16 %v175, %v174
    %v193 = vpack.c.b16 %v177, %v176
    %vm194 = vsmask.f32 7424
    %v196 = vshrl.u32 %v178, 16
    %v198 = vshll.u32 %v178, 16
    %v200 = vrot.slane %v198, 1
    %v201 = vor.u32 %v196, %v200
    %v203 = vshll.u32 %v179, 16
    %v205 = vrot.slane %v203, 1
    %v206 = vsel %vm194, %v201, %v205
    %v207 = vshrl.u32 %v179, 16
    %v209 = vor.u32 %v207, %v205
    %v211 = vshrl.u32 %v180, 16
    %v213 = vshll.u32 %v180, 16
    %v215 = vrot.slane %v213, 1
    %v216 = vor.u32 %v211, %v215
    %v218 = vshll.u32 %v181, 16
    %v220 = vrot.slane %v218, 1
    %v221 = vsel %vm194, %v216, %v220
    %v222 = vshrl.u32 %v181, 16
    %v224 = vor.u32 %v222, %v220
    %v226 = vshrl.u32 %v182, 16
    %v228 = vshll.u32 %v182, 16
    %v230 = vrot.slane %v228, 1
    %v231 = vor.u32 %v226, %v230
    %v233 = vshll.u32 %v183, 16
    %v235 = vrot.slane %v233, 1
    %v236 = vsel %vm194, %v231, %v235
    %v237 = vshrl.u32 %v183, 16
    %v239 = vor.u32 %v237, %v235
    %v241 = vshrl.u32 %v184, 16
    %v243 = vshll.u32 %v184, 16
    %v245 = vrot.slane %v243, 1
    %v246 = vor.u32 %v241, %v245
    %v248 = vshll.u32 %v185, 16
    %v250 = vrot.slane %v248, 1
    %v251 = vsel %vm194, %v246, %v250
    %v252 = vshrl.u32 %v185, 16
    %v254 = vor.u32 %v252, %v250
    %v256 = vshrl.u32 %v186, 16
    %v258 = vshll.u32 %v186, 16
    %v260 = vrot.slane %v258, 1
    %v261 = vor.u32 %v256, %v260
    %v263 = vshll.u32 %v187, 16
    %v265 = vrot.slane %v263, 1
    %v266 = vsel %vm194, %v261, %v265
    %v267 = vshrl.u32 %v187, 16
    %v269 = vor.u32 %v267, %v265
    %v271 = vshrl.u32 %v188, 16
    %v273 = vshll.u32 %v188, 16
    %v275 = vrot.slane %v273, 1
    %v276 = vor.u32 %v271, %v275
    %v278 = vshll.u32 %v189, 16
    %v280 = vrot.slane %v278, 1
    %v281 = vsel %vm194, %v276, %v280
    %v282 = vshrl.u32 %v189, 16
    %v284 = vor.u32 %v282, %v280
    %v286 = vshrl.u32 %v190, 16
    %v288 = vshll.u32 %v190, 16
    %v290 = vrot.slane %v288, 1
    %v291 = vor.u32 %v286, %v290
    %v293 = vshll.u32 %v191, 16
    %v295 = vrot.slane %v293, 1
    %v296 = vsel %vm194, %v291, %v295
    %v297 = vshrl.u32 %v191, 16
    %v299 = vor.u32 %v297, %v295
    %v301 = vshrl.u32 %v192, 16
    %v303 = vshll.u32 %v192, 16
    %v305 = vrot.slane %v303, 1
    %v306 = vor.u32 %v301, %v305
    %v308 = vshll.u32 %v193, 16
    %v310 = vrot.slane %v308, 1
    %v311 = vsel %vm194, %v306, %v310
    %v312 = vshrl.u32 %v193, 16
    %v314 = vor.u32 %v312, %v310
    %vm323 = vcmask 1047552
    %vm324 = vmand %vm323, %vm194
    %v325 = vsel %vm324, %v209, 0
    %v326 = vsel %vm324, %v224, 0
    %v327 = vsel %vm324, %v239, 0
    %v328 = vsel %vm324, %v254, 0
    %v329 = vsel %vm324, %v269, 0
    %v330 = vsel %vm324, %v284, 0
    %v331 = vsel %vm324, %v299, 0
    %v332 = vsel %vm324, %v314, 0
    %s333 = scalar_lea.vmem [#allocation5], 48
    %v334 = vld [vmem:[%s333] sm:$0xf]
    %v335 = vld [vmem:[%s333 + $0x4] sm:$0xf]
    %v336 = vld [vmem:[%s333 + $0x8] sm:$0xf]
    %v337 = vld [vmem:[%s333 + $0xc] sm:$0xf]
    %v338 = vld [vmem:[%s333 + $0x10] sm:$0xf]
    %v339 = vld [vmem:[%s333 + $0x14] sm:$0xf]
    %v340 = vld [vmem:[%s333 + $0x18] sm:$0xf]
    %v341 = vld [vmem:[%s333 + $0x1c] sm:$0xf]
    %v342 = vld [vmem:[%s333 + $0x20] sm:$0xf]
    %v343 = vld [vmem:[%s333 + $0x24] sm:$0xf]
    %v344 = vld [vmem:[%s333 + $0x28] sm:$0xf]
    %v345 = vld [vmem:[%s333 + $0x2c] sm:$0xf]
    %v358 = vunpack.c.l.b16 %v334
    %v359 = vunpack.c.l.b16 %v335
    %v360 = vunpack.c.l.b16 %v336
    %v361 = vunpack.c.l.b16 %v337
    %v362 = vunpack.c.l.b16 %v338
    %v363 = vunpack.c.l.b16 %v339
    %v364 = vunpack.c.l.b16 %v340
    %v365 = vunpack.c.l.b16 %v341
    %v366 = vunpack.c.l.b16 %v342
    %v367 = vunpack.c.l.b16 %v343
    %v368 = vunpack.c.l.b16 %v344
    %v369 = vunpack.c.l.b16 %v345
    %v370 = vpack.c.b16 %v359, %v358
    %v371 = vpack.c.b16 %v361, %v360
    %v372 = vpack.c.b16 %v363, %v362
    %v373 = vpack.c.b16 %v365, %v364
    %v374 = vpack.c.b16 %v367, %v366
    %v375 = vpack.c.b16 %v369, %v368
    %vm382 = vcmask 785408
    %v384 = vsel %vm382, %v206, 0
    %v387 = vsel %vm382, %v325, 0
    %v390 = vsel %vm382, %v221, 0
    %v393 = vsel %vm382, %v326, 0
    %v396 = vsel %vm382, %v236, 0
    %v399 = vsel %vm382, %v327, 0
    %v402 = vsel %vm382, %v251, 0
    %v405 = vsel %vm382, %v328, 0
    %v408 = vsel %vm382, %v266, 0
    %v411 = vsel %vm382, %v329, 0
    %v414 = vsel %vm382, %v281, 0
    %v417 = vsel %vm382, %v330, 0
    %v420 = vsel %vm382, %v296, 0
    %v423 = vsel %vm382, %v331, 0
    %v426 = vsel %vm382, %v311, 0
    %v429 = vsel %vm382, %v332, 0
    %431 = vmatprep.subr.bf16.mxu0 0
    %432 = vmatpush1.bf16.msra.mxu0 %v370
    %433 = vmatprep.subr.bf16.mxu0 0
    %434 = vmatpush1.bf16.msra.mxu0 %v371
    %435 = vmatprep.subr.bf16.mxu0 0
    %436 = vmatpush1.bf16.msra.mxu0 %v372
    %437 = vmatprep.subr.bf16.mxu0 0
    %438 = vmatpush1.bf16.msra.mxu0 %v373
    %439 = vmatprep.subr.bf16.mxu0 0
    %440 = vmatpush1.bf16.msra.mxu0 %v374
    %441 = vmatprep.subr.bf16.mxu0 0
    %442 = vmatpush1.bf16.msra.mxu0 %v375
    %443 = vmatprep.subr.bf16.mxu0 0
    %444 = vmatpush1.bf16.msra.mxu0 0
    %445 = vmatprep.subr.bf16.mxu0 0
    %446 = vmatpush1.bf16.msra.mxu0 0
    %447 = vmatprep.subr.bf16.mxu0 0
    %448 = vmatpush1.bf16.msra.mxu0 0
    %449 = vmatprep.subr.bf16.mxu0 0
    %450 = vmatpush1.bf16.msra.mxu0 0
    %451 = vmatprep.subr.bf16.mxu0 0
    %452 = vmatpush1.bf16.msra.mxu0 0
    %453 = vmatprep.subr.bf16.mxu0 0
    %454 = vmatpush1.bf16.msra.mxu0 0
    %455 = vmatprep.subr.bf16.mxu0 0
    %456 = vmatpush1.bf16.msra.mxu0 0
    %457 = vmatprep.subr.bf16.mxu0 0
    %458 = vmatpush1.bf16.msra.mxu0 0
    %459 = vmatprep.subr.bf16.mxu0 0
    %460 = vmatpush1.bf16.msra.mxu0 0
    %461 = vmatprep.subr.bf16.mxu0 0
    %462 = vmatpush1.bf16.msra.mxu0 0
    %463 = vmatprep.mubr.bf16.mxu0 0
    %464 = vmatmul.mubr.bf16.gmra.mrb[0].mxu0 %v384
    %v465 = vpop.f32.mrb[0].mxu0
    %v466 = vadd.f32 0.0, %v465
    %v467 = vpop.f32.mrb[0].mxu0
    %v468 = vpop.f32.mrb[0].mxu0
    %v469 = vadd.f32 0.0, %v468
    %v470 = vpop.f32.mrb[0].mxu0
    %471 = vmatprep.mubr.bf16.mxu0 0
    %472 = vmatmul.mubr.bf16.gmra.mrb[0].mxu0 %v387
    %v473 = vpop.f32.mrb[0].mxu0
    %v474 = vadd.f32 0.0, %v473
    %v475 = vpop.f32.mrb[0].mxu0
    %v476 = vpop.f32.mrb[0].mxu0
    %v477 = vadd.f32 0.0, %v476
    %v478 = vpop.f32.mrb[0].mxu0
    %479 = vmatprep.mubr.bf16.mxu0 0
    %480 = vmatmul.mubr.bf16.gmra.mrb[0].mxu0 %v390
    %v481 = vpop.f32.mrb[0].mxu0
    %v482 = vadd.f32 0.0, %v481
    %v483 = vpop.f32.mrb[0].mxu0
    %v484 = vpop.f32.mrb[0].mxu0
    %v485 = vadd.f32 0.0, %v484
    %v486 = vpop.f32.mrb[0].mxu0
    %487 = vmatprep.mubr.bf16.mxu0 0
    %488 = vmatmul.mubr.bf16.gmra.mrb[0].mxu0 %v393
    %v489 = vpop.f32.mrb[0].mxu0
    %v490 = vadd.f32 0.0, %v489
    %v491 = vpop.f32.mrb[0].mxu0
    %v492 = vpop.f32.mrb[0].mxu0
    %v493 = vadd.f32 0.0, %v492
    %v494 = vpop.f32.mrb[0].mxu0
    %495 = vmatprep.mubr.bf16.mxu0 0
    %496 = vmatmul.mubr.bf16.gmra.mrb[0].mxu0 %v396
    %v497 = vpop.f32.mrb[0].mxu0
    %v498 = vadd.f32 0.0, %v497
    %v499 = vpop.f32.mrb[0].mxu0
    %v500 = vpop.f32.mrb[0].mxu0
    %v501 = vadd.f32 0.0, %v500
    %v502 = vpop.f32.mrb[0].mxu0
    %503 = vmatprep.mubr.bf16.mxu0 0
    %504 = vmatmul.mubr.bf16.gmra.mrb[0].mxu0 %v399
    %v505 = vpop.f32.mrb[0].mxu0
    %v506 = vadd.f32 0.0, %v505
    %v507 = vpop.f32.mrb[0].mxu0
    %v508 = vpop.f32.mrb[0].mxu0
    %v509 = vadd.f32 0.0, %v508
    %v510 = vpop.f32.mrb[0].mxu0
    %511 = vmatprep.mubr.bf16.mxu0 0
    %512 = vmatmul.mubr.bf16.gmra.mrb[0].mxu0 %v402
    %v513 = vpop.f32.mrb[0].mxu0
    %v514 = vadd.f32 0.0, %v513
    %v515 = vpop.f32.mrb[0].mxu0
    %v516 = vpop.f32.mrb[0].mxu0
    %v517 = vadd.f32 0.0, %v516
    %v518 = vpop.f32.mrb[0].mxu0
    %519 = vmatprep.mubr.bf16.mxu0 0
    %520 = vmatmul.mubr.bf16.gmra.mrb[0].mxu0 %v405
    %v521 = vpop.f32.mrb[0].mxu0
    %v522 = vadd.f32 0.0, %v521
    %v523 = vpop.f32.mrb[0].mxu0
    %v524 = vpop.f32.mrb[0].mxu0
    %v525 = vadd.f32 0.0, %v524
    %v526 = vpop.f32.mrb[0].mxu0
    %527 = vmatprep.mubr.bf16.mxu0 0
    %528 = vmatmul.mubr.bf16.gmra.mrb[0].mxu0 %v408
    %v529 = vpop.f32.mrb[0].mxu0
    %v530 = vadd.f32 0.0, %v529
    %v531 = vpop.f32.mrb[0].mxu0
    %v532 = vpop.f32.mrb[0].mxu0
    %v533 = vadd.f32 0.0, %v532
    %v534 = vpop.f32.mrb[0].mxu0
    %535 = vmatprep.mubr.bf16.mxu0 0
    %536 = vmatmul.mubr.bf16.gmra.mrb[0].mxu0 %v411
    %v537 = vpop.f32.mrb[0].mxu0
    %v538 = vadd.f32 0.0, %v537
    %v539 = vpop.f32.mrb[0].mxu0
    %v540 = vpop.f32.mrb[0].mxu0
    %v541 = vadd.f32 0.0, %v540
    %v542 = vpop.f32.mrb[0].mxu0
    %543 = vmatprep.mubr.bf16.mxu0 0
    %544 = vmatmul.mubr.bf16.gmra.mrb[0].mxu0 %v414
    %v545 = vpop.f32.mrb[0].mxu0
    %v546 = vadd.f32 0.0, %v545
    %v547 = vpop.f32.mrb[0].mxu0
    %v548 = vpop.f32.mrb[0].mxu0
    %v549 = vadd.f32 0.0, %v548
    %v550 = vpop.f32.mrb[0].mxu0
    %551 = vmatprep.mubr.bf16.mxu0 0
    %552 = vmatmul.mubr.bf16.gmra.mrb[0].mxu0 %v417
    %v553 = vpop.f32.mrb[0].mxu0
    %v554 = vadd.f32 0.0, %v553
    %v555 = vpop.f32.mrb[0].mxu0
    %v556 = vpop.f32.mrb[0].mxu0
    %v557 = vadd.f32 0.0, %v556
    %v558 = vpop.f32.mrb[0].mxu0
    %559 = vmatprep.mubr.bf16.mxu0 0
    %560 = vmatmul.mubr.bf16.gmra.mrb[0].mxu0 %v420
    %v561 = vpop.f32.mrb[0].mxu0
    %v562 = vadd.f32 0.0, %v561
    %v563 = vpop.f32.mrb[0].mxu0
    %v564 = vpop.f32.mrb[0].mxu0
    %v565 = vadd.f32 0.0, %v564
    %v566 = vpop.f32.mrb[0].mxu0
    %567 = vmatprep.mubr.bf16.mxu0 0
    %568 = vmatmul.mubr.bf16.gmra.mrb[0].mxu0 %v423
    %v569 = vpop.f32.mrb[0].mxu0
    %v570 = vadd.f32 0.0, %v569
    %v571 = vpop.f32.mrb[0].mxu0
    %v572 = vpop.f32.mrb[0].mxu0
    %v573 = vadd.f32 0.0, %v572
    %v574 = vpop.f32.mrb[0].mxu0
    %575 = vmatprep.mubr.bf16.mxu0 0
    %576 = vmatmul.mubr.bf16.gmra.mrb[0].mxu0 %v426
    %v577 = vpop.f32.mrb[0].mxu0
    %v578 = vadd.f32 0.0, %v577
    %v579 = vpop.f32.mrb[0].mxu0
    %v580 = vpop.f32.mrb[0].mxu0
    %v581 = vadd.f32 0.0, %v580
    %v582 = vpop.f32.mrb[0].mxu0
    %583 = vmatprep.mubr.bf16.mxu0 0
    %584 = vmatmul.mubr.bf16.gmra.mrb[0].mxu0 %v429
    %v585 = vpop.f32.mrb[0].mxu0
    %v586 = vadd.f32 0.0, %v585
    %v587 = vpop.f32.mrb[0].mxu0
    %v588 = vpop.f32.mrb[0].mxu0
    %v589 = vadd.f32 0.0, %v588
    %v590 = vpop.f32.mrb[0].mxu0
    %591 = vdwg.mxu0
    %v604 = vunpack.c.l.b16 %v102
    %v605 = vunpack.c.l.b16 %v103
    %v606 = vunpack.c.l.b16 %v104
    %v607 = vunpack.c.l.b16 %v105
    %v608 = vunpack.c.l.b16 %v106
    %v609 = vunpack.c.l.b16 %v107
    %v610 = vunpack.c.l.b16 %v108
    %v611 = vunpack.c.l.b16 %v109
    %v612 = vunpack.c.l.b16 %v110
    %v613 = vunpack.c.l.b16 %v111
    %v614 = vunpack.c.l.b16 %v112
    %v615 = vunpack.c.l.b16 %v113
    %v616 = vpack.c.b16 %v605, %v604
    %v617 = vpack.c.b16 %v607, %v606
    %v618 = vpack.c.b16 %v609, %v608
    %v619 = vpack.c.b16 %v611, %v610
    %v620 = vpack.c.b16 %v613, %v612
    %v621 = vpack.c.b16 %v615, %v614
    %v628 = vsel %vm382, %v178, 0
    %v630 = vsel %vm382, %v179, 0
    %v632 = vsel %vm382, %v180, 0
    %v634 = vsel %vm382, %v181, 0
    %v636 = vsel %vm382, %v182, 0
    %v638 = vsel %vm382, %v183, 0
    %v640 = vsel %vm382, %v184, 0
    %v642 = vsel %vm382, %v185, 0
    %v644 = vsel %vm382, %v186, 0
    %v646 = vsel %vm382, %v187, 0
    %v648 = vsel %vm382, %v188, 0
    %v650 = vsel %vm382, %v189, 0
    %v652 = vsel %vm382, %v190, 0
    %v654 = vsel %vm382, %v191, 0
    %v656 = vsel %vm382, %v192, 0
    %v658 = vsel %vm382, %v193, 0
    %660 = vmatprep.subr.bf16.mxu0 0
    %661 = vmatpush1.bf16.msra.mxu0 %v616
    %662 = vmatprep.subr.bf16.mxu0 0
    %663 = vmatpush1.bf16.msra.mxu0 %v617
    %664 = vmatprep.subr.bf16.mxu0 0
    %665 = vmatpush1.bf16.msra.mxu0 %v618
    %666 = vmatprep.subr.bf16.mxu0 0
    %667 = vmatpush1.bf16.msra.mxu0 %v619
    %668 = vmatprep.subr.bf16.mxu0 0
    %669 = vmatpush1.bf16.msra.mxu0 %v620
    %670 = vmatprep.subr.bf16.mxu0 0
    %671 = vmatpush1.bf16.msra.mxu0 %v621
    %672 = vmatprep.subr.bf16.mxu0 0
    %673 = vmatpush1.bf16.msra.mxu0 0
    %674 = vmatprep.subr.bf16.mxu0 0
    %675 = vmatpush1.bf16.msra.mxu0 0
    %676 = vmatprep.subr.bf16.mxu0 0
    %677 = vmatpush1.bf16.msra.mxu0 0
    %678 = vmatprep.subr.bf16.mxu0 0
    %679 = vmatpush1.bf16.msra.mxu0 0
    %680 = vmatprep.subr.bf16.mxu0 0
    %681 = vmatpush1.bf16.msra.mxu0 0
    %682 = vmatprep.subr.bf16.mxu0 0
    %683 = vmatpush1.bf16.msra.mxu0 0
    %684 = vmatprep.subr.bf16.mxu0 0
    %685 = vmatpush1.bf16.msra.mxu0 0
    %686 = vmatprep.subr.bf16.mxu0 0
    %687 = vmatpush1.bf16.msra.mxu0 0
    %688 = vmatprep.subr.bf16.mxu0 0
    %689 = vmatpush1.bf16.msra.mxu0 0
    %690 = vmatprep.subr.bf16.mxu0 0
    %691 = vmatpush1.bf16.msra.mxu0 0
    %692 = vmatprep.mubr.bf16.mxu0 0
    %693 = vmatmul.mubr.bf16.gmra.mrb[0].mxu0 %v628
    %v694 = vpop.f32.mrb[0].mxu0
    %v695 = vadd.f32 %v466, %v694
    %v696 = vpop.f32.mrb[0].mxu0
    %v697 = vpop.f32.mrb[0].mxu0
    %v698 = vadd.f32 %v469, %v697
    %v699 = vpop.f32.mrb[0].mxu0
    %700 = vmatprep.mubr.bf16.mxu0 0
    %701 = vmatmul.mubr.bf16.gmra.mrb[0].mxu0 %v630
    %v702 = vpop.f32.mrb[0].mxu0
    %v703 = vadd.f32 %v474, %v702
    %v704 = vpop.f32.mrb[0].mxu0
    %v705 = vpop.f32.mrb[0].mxu0
    %v706 = vadd.f32 %v477, %v705
    %v707 = vpop.f32.mrb[0].mxu0
    %708 = vmatprep.mubr.bf16.mxu0 0
    %709 = vmatmul.mubr.bf16.gmra.mrb[0].mxu0 %v632
    %v710 = vpop.f32.mrb[0].mxu0
    %v711 = vadd.f32 %v482, %v710
    %v712 = vpop.f32.mrb[0].mxu0
    %v713 = vpop.f32.mrb[0].mxu0
    %v714 = vadd.f32 %v485, %v713
    %v715 = vpop.f32.mrb[0].mxu0
    %716 = vmatprep.mubr.bf16.mxu0 0
    %717 = vmatmul.mubr.bf16.gmra.mrb[0].mxu0 %v634
    %v718 = vpop.f32.mrb[0].mxu0
    %v719 = vadd.f32 %v490, %v718
    %v720 = vpop.f32.mrb[0].mxu0
    %v721 = vpop.f32.mrb[0].mxu0
    %v722 = vadd.f32 %v493, %v721
    %v723 = vpop.f32.mrb[0].mxu0
    %724 = vmatprep.mubr.bf16.mxu0 0
    %725 = vmatmul.mubr.bf16.gmra.mrb[0].mxu0 %v636
    %v726 = vpop.f32.mrb[0].mxu0
    %v727 = vadd.f32 %v498, %v726
    %v728 = vpop.f32.mrb[0].mxu0
    %v729 = vpop.f32.mrb[0].mxu0
    %v730 = vadd.f32 %v501, %v729
    %v731 = vpop.f32.mrb[0].mxu0
    %732 = vmatprep.mubr.bf16.mxu0 0
    %733 = vmatmul.mubr.bf16.gmra.mrb[0].mxu0 %v638
    %v734 = vpop.f32.mrb[0].mxu0
    %v735 = vadd.f32 %v506, %v734
    %v736 = vpop.f32.mrb[0].mxu0
    %v737 = vpop.f32.mrb[0].mxu0
    %v738 = vadd.f32 %v509, %v737
    %v739 = vpop.f32.mrb[0].mxu0
    %740 = vmatprep.mubr.bf16.mxu0 0
    %741 = vmatmul.mubr.bf16.gmra.mrb[0].mxu0 %v640
    %v742 = vpop.f32.mrb[0].mxu0
    %v743 = vadd.f32 %v514, %v742
    %v744 = vpop.f32.mrb[0].mxu0
    %v745 = vpop.f32.mrb[0].mxu0
    %v746 = vadd.f32 %v517, %v745
    %v747 = vpop.f32.mrb[0].mxu0
    %748 = vmatprep.mubr.bf16.mxu0 0
    %749 = vmatmul.mubr.bf16.gmra.mrb[0].mxu0 %v642
    %v750 = vpop.f32.mrb[0].mxu0
    %v751 = vadd.f32 %v522, %v750
    %v752 = vpop.f32.mrb[0].mxu0
    %v753 = vpop.f32.mrb[0].mxu0
    %v754 = vadd.f32 %v525, %v753
    %v755 = vpop.f32.mrb[0].mxu0
    %756 = vmatprep.mubr.bf16.mxu0 0
    %757 = vmatmul.mubr.bf16.gmra.mrb[0].mxu0 %v644
    %v758 = vpop.f32.mrb[0].mxu0
    %v759 = vadd.f32 %v530, %v758
    %v760 = vpop.f32.mrb[0].mxu0
    %v761 = vpop.f32.mrb[0].mxu0
    %v762 = vadd.f32 %v533, %v761
    %v763 = vpop.f32.mrb[0].mxu0
    %764 = vmatprep.mubr.bf16.mxu0 0
    %765 = vmatmul.mubr.bf16.gmra.mrb[0].mxu0 %v646
    %v766 = vpop.f32.mrb[0].mxu0
    %v767 = vadd.f32 %v538, %v766
    %v768 = vpop.f32.mrb[0].mxu0
    %v769 = vpop.f32.mrb[0].mxu0
    %v770 = vadd.f32 %v541, %v769
    %v771 = vpop.f32.mrb[0].mxu0
    %772 = vmatprep.mubr.bf16.mxu0 0
    %773 = vmatmul.mubr.bf16.gmra.mrb[0].mxu0 %v648
    %v774 = vpop.f32.mrb[0].mxu0
    %v775 = vadd.f32 %v546, %v774
    %v776 = vpop.f32.mrb[0].mxu0
    %v777 = vpop.f32.mrb[0].mxu0
    %v778 = vadd.f32 %v549, %v777
    %v779 = vpop.f32.mrb[0].mxu0
    %780 = vmatprep.mubr.bf16.mxu0 0
    %781 = vmatmul.mubr.bf16.gmra.mrb[0].mxu0 %v650
    %v782 = vpop.f32.mrb[0].mxu0
    %v783 = vadd.f32 %v554, %v782
    %v784 = vpop.f32.mrb[0].mxu0
    %v785 = vpop.f32.mrb[0].mxu0
    %v786 = vadd.f32 %v557, %v785
    %v787 = vpop.f32.mrb[0].mxu0
    %788 = vmatprep.mubr.bf16.mxu0 0
    %789 = vmatmul.mubr.bf16.gmra.mrb[0].mxu0 %v652
    %v790 = vpop.f32.mrb[0].mxu0
    %v791 = vadd.f32 %v562, %v790
    %v792 = vpop.f32.mrb[0].mxu0
    %v793 = vpop.f32.mrb[0].mxu0
    %v794 = vadd.f32 %v565, %v793
    %v795 = vpop.f32.mrb[0].mxu0
    %796 = vmatprep.mubr.bf16.mxu0 0
    %797 = vmatmul.mubr.bf16.gmra.mrb[0].mxu0 %v654
    %v798 = vpop.f32.mrb[0].mxu0
    %v799 = vadd.f32 %v570, %v798
    %v800 = vpop.f32.mrb[0].mxu0
    %v801 = vpop.f32.mrb[0].mxu0
    %v802 = vadd.f32 %v573, %v801
    %v803 = vpop.f32.mrb[0].mxu0
    %804 = vmatprep.mubr.bf16.mxu0 0
    %805 = vmatmul.mubr.bf16.gmra.mrb[0].mxu0 %v656
    %v806 = vpop.f32.mrb[0].mxu0
    %v807 = vadd.f32 %v578, %v806
    %v808 = vpop.f32.mrb[0].mxu0
    %v809 = vpop.f32.mrb[0].mxu0
    %v810 = vadd.f32 %v581, %v809
    %v811 = vpop.f32.mrb[0].mxu0
    %812 = vmatprep.mubr.bf16.mxu0 0
    %813 = vmatmul.mubr.bf16.gmra.mrb[0].mxu0 %v658
    %v814 = vpop.f32.mrb[0].mxu0
    %v815 = vadd.f32 %v586, %v814
    %v816 = vpop.f32.mrb[0].mxu0
    %v817 = vpop.f32.mrb[0].mxu0
    %v818 = vadd.f32 %v589, %v817
    %v819 = vpop.f32.mrb[0].mxu0
    %820 = vdwg.mxu0
    %vm821 = vcmask 1046528
    %v822 = vrot.slane %v178, 1
    %v823 = vrot.slane %v179, 1
    %v824 = vsel %vm821, %v822, %v823
    %v825 = vrot.slane %v180, 1
    %v826 = vrot.slane %v181, 1
    %v827 = vsel %vm821, %v825, %v826
    %v828 = vrot.slane %v182, 1
    %v829 = vrot.slane %v183, 1
    %v830 = vsel %vm821, %v828, %v829
    %v831 = vrot.slane %v184, 1
    %v832 = vrot.slane %v185, 1
    %v833 = vsel %vm821, %v831, %v832
    %v834 = vrot.slane %v186, 1
    %v835 = vrot.slane %v187, 1
    %v836 = vsel %vm821, %v834, %v835
    %v837 = vrot.slane %v188, 1
    %v838 = vrot.slane %v189, 1
    %v839 = vsel %vm821, %v837, %v838
    %v840 = vrot.slane %v190, 1
    %v841 = vrot.slane %v191, 1
    %v842 = vsel %vm821, %v840, %v841
    %v843 = vrot.slane %v192, 1
    %v844 = vrot.slane %v193, 1
    %v845 = vsel %vm821, %v843, %v844
    %vm846 = vcmask 1046528
    %v849 = vsel %vm846, %v823, 0
    %v851 = vsel %vm846, %v826, 0
    %v853 = vsel %vm846, %v829, 0
    %v855 = vsel %vm846, %v832, 0
    %v857 = vsel %vm846, %v835, 0
    %v859 = vsel %vm846, %v838, 0
    %v861 = vsel %vm846, %v841, 0
    %v863 = vsel %vm846, %v844, 0
    %s864 = scalar_lea.vmem [#allocation5], 96
    %v865 = vld [vmem:[%s864] sm:$0xf]
    %v866 = vld [vmem:[%s864 + $0x4] sm:$0xf]
    %v867 = vld [vmem:[%s864 + $0x8] sm:$0xf]
    %v868 = vld [vmem:[%s864 + $0xc] sm:$0xf]
    %v869 = vld [vmem:[%s864 + $0x10] sm:$0xf]
    %v870 = vld [vmem:[%s864 + $0x14] sm:$0xf]
    %v871 = vld [vmem:[%s864 + $0x18] sm:$0xf]
    %v872 = vld [vmem:[%s864 + $0x1c] sm:$0xf]
    %v873 = vld [vmem:[%s864 + $0x20] sm:$0xf]
    %v874 = vld [vmem:[%s864 + $0x24] sm:$0xf]
    %v875 = vld [vmem:[%s864 + $0x28] sm:$0xf]
    %v876 = vld [vmem:[%s864 + $0x2c] sm:$0xf]
    %v889 = vunpack.c.l.b16 %v865
    %v890 = vunpack.c.l.b16 %v866
    %v891 = vunpack.c.l.b16 %v867
    %v892 = vunpack.c.l.b16 %v868
    %v893 = vunpack.c.l.b16 %v869
    %v894 = vunpack.c.l.b16 %v870
    %v895 = vunpack.c.l.b16 %v871
    %v896 = vunpack.c.l.b16 %v872
    %v897 = vunpack.c.l.b16 %v873
    %v898 = vunpack.c.l.b16 %v874
    %v899 = vunpack.c.l.b16 %v875
    %v900 = vunpack.c.l.b16 %v876
    %v901 = vpack.c.b16 %v890, %v889
    %v902 = vpack.c.b16 %v892, %v891
    %v903 = vpack.c.b16 %v894, %v893
    %v904 = vpack.c.b16 %v896, %v895
    %v905 = vpack.c.b16 %v898, %v897
    %v906 = vpack.c.b16 %v900, %v899
    %v914 = vsel %vm382, %v824, 0
    %v916 = vsel %vm382, %v849, 0
    %v919 = vsel %vm382, %v827, 0
    %v921 = vsel %vm382, %v851, 0
    %v924 = vsel %vm382, %v830, 0
    %v926 = vsel %vm382, %v853, 0
    %v929 = vsel %vm382, %v833, 0
    %v931 = vsel %vm382, %v855, 0
    %v934 = vsel %vm382, %v836, 0
    %v936 = vsel %vm382, %v857, 0
    %v939 = vsel %vm382, %v839, 0
    %v941 = vsel %vm382, %v859, 0
    %v944 = vsel %vm382, %v842, 0
    %v946 = vsel %vm382, %v861, 0
    %v949 = vsel %vm382, %v845, 0
    %v951 = vsel %vm382, %v863, 0
    %953 = vmatprep.subr.bf16.mxu0 0
    %954 = vmatpush1.bf16.msra.mxu0 %v901
    %955 = vmatprep.subr.bf16.mxu0 0
    %956 = vmatpush1.bf16.msra.mxu0 %v902
    %957 = vmatprep.subr.bf16.mxu0 0
    %958 = vmatpush1.bf16.msra.mxu0 %v903
    %959 = vmatprep.subr.bf16.mxu0 0
    %960 = vmatpush1.bf16.msra.mxu0 %v904
    %961 = vmatprep.subr.bf16.mxu0 0
    %962 = vmatpush1.bf16.msra.mxu0 %v905
    %963 = vmatprep.subr.bf16.mxu0 0
    %964 = vmatpush1.bf16.msra.mxu0 %v906
    %965 = vmatprep.subr.bf16.mxu0 0
    %966 = vmatpush1.bf16.msra.mxu0 0
    %967 = vmatprep.subr.bf16.mxu0 0
    %968 = vmatpush1.bf16.msra.mxu0 0
    %969 = vmatprep.subr.bf16.mxu0 0
    %970 = vmatpush1.bf16.msra.mxu0 0
    %971 = vmatprep.subr.bf16.mxu0 0
    %972 = vmatpush1.bf16.msra.mxu0 0
    %973 = vmatprep.subr.bf16.mxu0 0
    %974 = vmatpush1.bf16.msra.mxu0 0
    %975 = vmatprep.subr.bf16.mxu0 0
    %976 = vmatpush1.bf16.msra.mxu0 0
    %977 = vmatprep.subr.bf16.mxu0 0
    %978 = vmatpush1.bf16.msra.mxu0 0
    %979 = vmatprep.subr.bf16.mxu0 0
    %980 = vmatpush1.bf16.msra.mxu0 0
    %981 = vmatprep.subr.bf16.mxu0 0
    %982 = vmatpush1.bf16.msra.mxu0 0
    %983 = vmatprep.subr.bf16.mxu0 0
    %984 = vmatpush1.bf16.msra.mxu0 0
    %985 = vmatprep.mubr.bf16.mxu0 0
    %986 = vmatmul.mubr.bf16.gmra.mrb[0].mxu0 %v914
    %v987 = vpop.f32.mrb[0].mxu0
    %v988 = vadd.f32 0.0, %v987
    %v989 = vpop.f32.mrb[0].mxu0
    %v990 = vpop.f32.mrb[0].mxu0
    %v991 = vadd.f32 0.0, %v990
    %v992 = vpop.f32.mrb[0].mxu0
    %993 = vmatprep.mubr.bf16.mxu0 0
    %994 = vmatmul.mubr.bf16.gmra.mrb[0].mxu0 %v916
    %v995 = vpop.f32.mrb[0].mxu0
    %v996 = vadd.f32 0.0, %v995
    %v997 = vpop.f32.mrb[0].mxu0
    %v998 = vpop.f32.mrb[0].mxu0
    %v999 = vadd.f32 0.0, %v998
    %v1000 = vpop.f32.mrb[0].mxu0
    %1001 = vmatprep.mubr.bf16.mxu0 0
    %1002 = vmatmul.mubr.bf16.gmra.mrb[0].mxu0 %v919
    %v1003 = vpop.f32.mrb[0].mxu0
    %v1004 = vadd.f32 0.0, %v1003
    %v1005 = vpop.f32.mrb[0].mxu0
    %v1006 = vpop.f32.mrb[0].mxu0
    %v1007 = vadd.f32 0.0, %v1006
    %v1008 = vpop.f32.mrb[0].mxu0
    %1009 = vmatprep.mubr.bf16.mxu0 0
    %1010 = vmatmul.mubr.bf16.gmra.mrb[0].mxu0 %v921
    %v1011 = vpop.f32.mrb[0].mxu0
    %v1012 = vadd.f32 0.0, %v1011
    %v1013 = vpop.f32.mrb[0].mxu0
    %v1014 = vpop.f32.mrb[0].mxu0
    %v1015 = vadd.f32 0.0, %v1014
    %v1016 = vpop.f32.mrb[0].mxu0
    %1017 = vmatprep.mubr.bf16.mxu0 0
    %1018 = vmatmul.mubr.bf16.gmra.mrb[0].mxu0 %v924
    %v1019 = vpop.f32.mrb[0].mxu0
    %v1020 = vadd.f32 0.0, %v1019
    %v1021 = vpop.f32.mrb[0].mxu0
    %v1022 = vpop.f32.mrb[0].mxu0
    %v1023 = vadd.f32 0.0, %v1022
    %v1024 = vpop.f32.mrb[0].mxu0
    %1025 = vmatprep.mubr.bf16.mxu0 0
    %1026 = vmatmul.mubr.bf16.gmra.mrb[0].mxu0 %v926
    %v1027 = vpop.f32.mrb[0].mxu0
    %v1028 = vadd.f32 0.0, %v1027
    %v1029 = vpop.f32.mrb[0].mxu0
    %v1030 = vpop.f32.mrb[0].mxu0
    %v1031 = vadd.f32 0.0, %v1030
    %v1032 = vpop.f32.mrb[0].mxu0
    %1033 = vmatprep.mubr.bf16.mxu0 0
    %1034 = vmatmul.mubr.bf16.gmra.mrb[0].mxu0 %v929
    %v1035 = vpop.f32.mrb[0].mxu0
    %v1036 = vadd.f32 0.0, %v1035
    %v1037 = vpop.f32.mrb[0].mxu0
    %v1038 = vpop.f32.mrb[0].mxu0
    %v1039 = vadd.f32 0.0, %v1038
    %v1040 = vpop.f32.mrb[0].mxu0
    %1041 = vmatprep.mubr.bf16.mxu0 0
    %1042 = vmatmul.mubr.bf16.gmra.mrb[0].mxu0 %v931
    %v1043 = vpop.f32.mrb[0].mxu0
    %v1044 = vadd.f32 0.0, %v1043
    %v1045 = vpop.f32.mrb[0].mxu0
    %v1046 = vpop.f32.mrb[0].mxu0
    %v1047 = vadd.f32 0.0, %v1046
    %v1048 = vpop.f32.mrb[0].mxu0
    %1049 = vmatprep.mubr.bf16.mxu0 0
    %1050 = vmatmul.mubr.bf16.gmra.mrb[0].mxu0 %v934
    %v1051 = vpop.f32.mrb[0].mxu0
    %v1052 = vadd.f32 0.0, %v1051
    %v1053 = vpop.f32.mrb[0].mxu0
    %v1054 = vpop.f32.mrb[0].mxu0
    %v1055 = vadd.f32 0.0, %v1054
    %v1056 = vpop.f32.mrb[0].mxu0
    %1057 = vmatprep.mubr.bf16.mxu0 0
    %1058 = vmatmul.mubr.bf16.gmra.mrb[0].mxu0 %v936
    %v1059 = vpop.f32.mrb[0].mxu0
    %v1060 = vadd.f32 0.0, %v1059
    %v1061 = vpop.f32.mrb[0].mxu0
    %v1062 = vpop.f32.mrb[0].mxu0
    %v1063 = vadd.f32 0.0, %v1062
    %v1064 = vpop.f32.mrb[0].mxu0
    %1065 = vmatprep.mubr.bf16.mxu0 0
    %1066 = vmatmul.mubr.bf16.gmra.mrb[0].mxu0 %v939
    %v1067 = vpop.f32.mrb[0].mxu0
    %v1068 = vadd.f32 0.0, %v1067
    %v1069 = vpop.f32.mrb[0].mxu0
    %v1070 = vpop.f32.mrb[0].mxu0
    %v1071 = vadd.f32 0.0, %v1070
    %v1072 = vpop.f32.mrb[0].mxu0
    %1073 = vmatprep.mubr.bf16.mxu0 0
    %1074 = vmatmul.mubr.bf16.gmra.mrb[0].mxu0 %v941
    %v1075 = vpop.f32.mrb[0].mxu0
    %v1076 = vadd.f32 0.0, %v1075
    %v1077 = vpop.f32.mrb[0].mxu0
    %v1078 = vpop.f32.mrb[0].mxu0
    %v1079 = vadd.f32 0.0, %v1078
    %v1080 = vpop.f32.mrb[0].mxu0
    %1081 = vmatprep.mubr.bf16.mxu0 0
    %1082 = vmatmul.mubr.bf16.gmra.mrb[0].mxu0 %v944
    %v1083 = vpop.f32.mrb[0].mxu0
    %v1084 = vadd.f32 0.0, %v1083
    %v1085 = vpop.f32.mrb[0].mxu0
    %v1086 = vpop.f32.mrb[0].mxu0
    %v1087 = vadd.f32 0.0, %v1086
    %v1088 = vpop.f32.mrb[0].mxu0
    %1089 = vmatprep.mubr.bf16.mxu0 0
    %1090 = vmatmul.mubr.bf16.gmra.mrb[0].mxu0 %v946
    %v1091 = vpop.f32.mrb[0].mxu0
    %v1092 = vadd.f32 0.0, %v1091
    %v1093 = vpop.f32.mrb[0].mxu0
    %v1094 = vpop.f32.mrb[0].mxu0
    %v1095 = vadd.f32 0.0, %v1094
    %v1096 = vpop.f32.mrb[0].mxu0
    %1097 = vmatprep.mubr.bf16.mxu0 0
    %1098 = vmatmul.mubr.bf16.gmra.mrb[0].mxu0 %v949
    %v1099 = vpop.f32.mrb[0].mxu0
    %v1100 = vadd.f32 0.0, %v1099
    %v1101 = vpop.f32.mrb[0].mxu0
    %v1102 = vpop.f32.mrb[0].mxu0
    %v1103 = vadd.f32 0.0, %v1102
    %v1104 = vpop.f32.mrb[0].mxu0
    %1105 = vmatprep.mubr.bf16.mxu0 0
    %1106 = vmatmul.mubr.bf16.gmra.mrb[0].mxu0 %v951
    %v1107 = vpop.f32.mrb[0].mxu0
    %v1108 = vadd.f32 0.0, %v1107
    %v1109 = vpop.f32.mrb[0].mxu0
    %v1110 = vpop.f32.mrb[0].mxu0
    %v1111 = vadd.f32 0.0, %v1110
    %v1112 = vpop.f32.mrb[0].mxu0
    %1113 = vdwg.mxu0
    %v1114 = vadd.f32 %v695, %v988
    %v1115 = vadd.f32 %v698, %v991
    %v1116 = vadd.f32 %v703, %v996
    %v1117 = vadd.f32 %v706, %v999
    %v1118 = vadd.f32 %v711, %v1004
    %v1119 = vadd.f32 %v714, %v1007
    %v1120 = vadd.f32 %v719, %v1012
    %v1121 = vadd.f32 %v722, %v1015
    %v1122 = vadd.f32 %v727, %v1020
    %v1123 = vadd.f32 %v730, %v1023
    %v1124 = vadd.f32 %v735, %v1028
    %v1125 = vadd.f32 %v738, %v1031
    %v1126 = vadd.f32 %v743, %v1036
    %v1127 = vadd.f32 %v746, %v1039
    %v1128 = vadd.f32 %v751, %v1044
    %v1129 = vadd.f32 %v754, %v1047
    %v1130 = vadd.f32 %v759, %v1052
    %v1131 = vadd.f32 %v762, %v1055
    %v1132 = vadd.f32 %v767, %v1060
    %v1133 = vadd.f32 %v770, %v1063
    %v1134 = vadd.f32 %v775, %v1068
    %v1135 = vadd.f32 %v778, %v1071
    %v1136 = vadd.f32 %v783, %v1076
    %v1137 = vadd.f32 %v786, %v1079
    %v1138 = vadd.f32 %v791, %v1084
    %v1139 = vadd.f32 %v794, %v1087
    %v1140 = vadd.f32 %v799, %v1092
    %v1141 = vadd.f32 %v802, %v1095
    %v1142 = vadd.f32 %v807, %v1100
    %v1143 = vadd.f32 %v810, %v1103
    %v1144 = vadd.f32 %v815, %v1108
    %v1145 = vadd.f32 %v818, %v1111
    %v1146 = vld [vmem:[%s3] sm:$0x1]
    %v1148 = vlaneseq
    %v1149 = vshrl.u32 %v1148, 7
    %v1150 = vsub.s32 0, %v1149
    %v1151 = vrot.slane %v1146, %v1150
    %v1153 = vadd.f32 %v1114, %v1151
    %v1154 = vadd.f32 %v1115, %v1151
    %v1155 = vadd.f32 %v1116, %v1151
    %v1156 = vadd.f32 %v1117, %v1151
    %v1157 = vadd.f32 %v1118, %v1151
    %v1158 = vadd.f32 %v1119, %v1151
    %v1159 = vadd.f32 %v1120, %v1151
    %v1160 = vadd.f32 %v1121, %v1151
    %v1161 = vadd.f32 %v1122, %v1151
    %v1162 = vadd.f32 %v1123, %v1151
    %v1163 = vadd.f32 %v1124, %v1151
    %v1164 = vadd.f32 %v1125, %v1151
    %v1165 = vadd.f32 %v1126, %v1151
    %v1166 = vadd.f32 %v1127, %v1151
    %v1167 = vadd.f32 %v1128, %v1151
    %v1168 = vadd.f32 %v1129, %v1151
    %v1169 = vadd.f32 %v1130, %v1151
    %v1170 = vadd.f32 %v1131, %v1151
    %v1171 = vadd.f32 %v1132, %v1151
    %v1172 = vadd.f32 %v1133, %v1151
    %v1173 = vadd.f32 %v1134, %v1151
    %v1174 = vadd.f32 %v1135, %v1151
    %v1175 = vadd.f32 %v1136, %v1151
    %v1176 = vadd.f32 %v1137, %v1151
    %v1177 = vadd.f32 %v1138, %v1151
    %v1178 = vadd.f32 %v1139, %v1151
    %v1179 = vadd.f32 %v1140, %v1151
    %v1180 = vadd.f32 %v1141, %v1151
    %v1181 = vadd.f32 %v1142, %v1151
    %v1182 = vadd.f32 %v1143, %v1151
    %v1183 = vadd.f32 %v1144, %v1151
    %v1184 = vadd.f32 %v1145, %v1151
    %v1185 = vtanh.pop %v1153
    %v1186 = vtanh.pop %v1154
    %v1187 = vtanh.pop %v1155
    %v1188 = vtanh.pop %v1156
    %v1189 = vtanh.pop %v1157
    %v1190 = vtanh.pop %v1158
    %v1191 = vtanh.pop %v1159
    %v1192 = vtanh.pop %v1160
    %v1193 = vtanh.pop %v1161
    %v1194 = vtanh.pop %v1162
    %v1195 = vtanh.pop %v1163
    %v1196 = vtanh.pop %v1164
    %v1197 = vtanh.pop %v1165
    %v1198 = vtanh.pop %v1166
    %v1199 = vtanh.pop %v1167
    %v1200 = vtanh.pop %v1168
    %v1201 = vtanh.pop %v1169
    %v1202 = vtanh.pop %v1170
    %v1203 = vtanh.pop %v1171
    %v1204 = vtanh.pop %v1172
    %v1205 = vtanh.pop %v1173
    %v1206 = vtanh.pop %v1174
    %v1207 = vtanh.pop %v1175
    %v1208 = vtanh.pop %v1176
    %v1209 = vtanh.pop %v1177
    %v1210 = vtanh.pop %v1178
    %v1211 = vtanh.pop %v1179
    %v1212 = vtanh.pop %v1180
    %v1213 = vtanh.pop %v1181
    %v1214 = vtanh.pop %v1182
    %v1215 = vtanh.pop %v1183
    %v1216 = vtanh.pop %v1184
    %v1217 = vlaneseq
    %v1218 = vshrl.u32 %v1217, 7
    %v1219 = vadd.s32 %v1218, 8
    %v1220 = vadd.s32 %v1218, 16
    %v1221 = vadd.s32 %v1218, 24
    %v1222 = vld [vmem:[%s1] sm:$0x1]
    %v1223 = vld [vmem:[%s1 + $0x1] sm:$0x1]
    %v1224 = vld [vmem:[%s1 + $0x2] sm:$0x1]
    %v1225 = vld [vmem:[%s1 + $0x3] sm:$0x1]
    %v1226 = vld [vmem:[%s1 + $0x4] sm:$0x1]
    %v1227 = vld [vmem:[%s1 + $0x5] sm:$0x1]
    %v1228 = vld [vmem:[%s1 + $0x6] sm:$0x1]
    %v1229 = vld [vmem:[%s1 + $0x7] sm:$0x1]
    %vm1230 = vcmp.lt.s32.totalorder %v1218, 30
    %vm1231 = vcmp.lt.s32.totalorder %v1219, 30
    %vm1232 = vcmp.lt.s32.totalorder %v1220, 30
    %vm1233 = vcmp.lt.s32.totalorder %v1221, 30
    %v1234 = vlaneseq
    %v1235 = vshrl.u32 %v1234, 7
    %v1236 = vsub.s32 0, %v1235
    %v1237 = vrot.slane %v1222, %v1236
    %v1238 = vlaneseq
    %v1239 = vshrl.u32 %v1238, 7
    %v1240 = vsub.s32 0, %v1239
    %v1241 = vrot.slane %v1223, %v1240
    %v1242 = vlaneseq
    %v1243 = vshrl.u32 %v1242, 7
    %v1244 = vsub.s32 0, %v1243
    %v1245 = vrot.slane %v1224, %v1244
    %v1246 = vlaneseq
    %v1247 = vshrl.u32 %v1246, 7
    %v1248 = vsub.s32 0, %v1247
    %v1249 = vrot.slane %v1225, %v1248
    %v1250 = vlaneseq
    %v1251 = vshrl.u32 %v1250, 7
    %v1252 = vsub.s32 0, %v1251
    %v1253 = vrot.slane %v1226, %v1252
    %v1254 = vlaneseq
    %v1255 = vshrl.u32 %v1254, 7
    %v1256 = vsub.s32 0, %v1255
    %v1257 = vrot.slane %v1227, %v1256
    %v1258 = vlaneseq
    %v1259 = vshrl.u32 %v1258, 7
    %v1260 = vsub.s32 0, %v1259
    %v1261 = vrot.slane %v1228, %v1260
    %v1262 = vlaneseq
    %v1263 = vshrl.u32 %v1262, 7
    %v1264 = vsub.s32 0, %v1263
    %v1265 = vrot.slane %v1229, %v1264
    %vm1266 = vcmp.le.s32.totalorder %v1218, %v1237
    %vm1267 = vcmp.le.s32.totalorder %v1219, %v1237
    %vm1268 = vcmp.le.s32.totalorder %v1220, %v1237
    %vm1269 = vcmp.le.s32.totalorder %v1221, %v1237
    %vm1270 = vcmp.le.s32.totalorder %v1218, %v1241
    %vm1271 = vcmp.le.s32.totalorder %v1219, %v1241
    %vm1272 = vcmp.le.s32.totalorder %v1220, %v1241
    %vm1273 = vcmp.le.s32.totalorder %v1221, %v1241
    %vm1274 = vcmp.le.s32.totalorder %v1218, %v1245
    %vm1275 = vcmp.le.s32.totalorder %v1219, %v1245
    %vm1276 = vcmp.le.s32.totalorder %v1220, %v1245
    %vm1277 = vcmp.le.s32.totalorder %v1221, %v1245
    %vm1278 = vcmp.le.s32.totalorder %v1218, %v1249
    %vm1279 = vcmp.le.s32.totalorder %v1219, %v1249
    %vm1280 = vcmp.le.s32.totalorder %v1220, %v1249
    %vm1281 = vcmp.le.s32.totalorder %v1221, %v1249
    %vm1282 = vcmp.le.s32.totalorder %v1218, %v1253
    %vm1283 = vcmp.le.s32.totalorder %v1219, %v1253
    %vm1284 = vcmp.le.s32.totalorder %v1220, %v1253
    %vm1285 = vcmp.le.s32.totalorder %v1221, %v1253
    %vm1286 = vcmp.le.s32.totalorder %v1218, %v1257
    %vm1287 = vcmp.le.s32.totalorder %v1219, %v1257
    %vm1288 = vcmp.le.s32.totalorder %v1220, %v1257
    %vm1289 = vcmp.le.s32.totalorder %v1221, %v1257
    %vm1290 = vcmp.le.s32.totalorder %v1218, %v1261
    %vm1291 = vcmp.le.s32.totalorder %v1219, %v1261
    %vm1292 = vcmp.le.s32.totalorder %v1220, %v1261
    %vm1293 = vcmp.le.s32.totalorder %v1221, %v1261
    %vm1294 = vcmp.le.s32.totalorder %v1218, %v1265
    %vm1295 = vcmp.le.s32.totalorder %v1219, %v1265
    %vm1296 = vcmp.le.s32.totalorder %v1220, %v1265
    %vm1297 = vcmp.le.s32.totalorder %v1221, %v1265
    %vm1298 = vmand %vm1266, %vm1230
    %vm1299 = vmand %vm1267, %vm1231
    %vm1300 = vmand %vm1268, %vm1232
    %vm1301 = vmand %vm1269, %vm1233
    %vm1302 = vmand %vm1270, %vm1230
    %vm1303 = vmand %vm1271, %vm1231
    %vm1304 = vmand %vm1272, %vm1232
    %vm1305 = vmand %vm1273, %vm1233
    %vm1306 = vmand %vm1274, %vm1230
    %vm1307 = vmand %vm1275, %vm1231
    %vm1308 = vmand %vm1276, %vm1232
    %vm1309 = vmand %vm1277, %vm1233
    %vm1310 = vmand %vm1278, %vm1230
    %vm1311 = vmand %vm1279, %vm1231
    %vm1312 = vmand %vm1280, %vm1232
    %vm1313 = vmand %vm1281, %vm1233
    %vm1314 = vmand %vm1282, %vm1230
    %vm1315 = vmand %vm1283, %vm1231
    %vm1316 = vmand %vm1284, %vm1232
    %vm1317 = vmand %vm1285, %vm1233
    %vm1318 = vmand %vm1286, %vm1230
    %vm1319 = vmand %vm1287, %vm1231
    %vm1320 = vmand %vm1288, %vm1232
    %vm1321 = vmand %vm1289, %vm1233
    %vm1322 = vmand %vm1290, %vm1230
    %vm1323 = vmand %vm1291, %vm1231
    %vm1324 = vmand %vm1292, %vm1232
    %vm1325 = vmand %vm1293, %vm1233
    %vm1326 = vmand %vm1294, %vm1230
    %vm1327 = vmand %vm1295, %vm1231
    %vm1328 = vmand %vm1296, %vm1232
    %vm1329 = vmand %vm1297, %vm1233
    %v1330 = vsel %vm1298, 1, 0
    %v1331 = vsel %vm1299, 1, 0
    %v1332 = vsel %vm1300, 1, 0
    %v1333 = vsel %vm1301, 1, 0
    %v1334 = vsel %vm1302, 1, 0
    %v1335 = vsel %vm1303, 1, 0
    %v1336 = vsel %vm1304, 1, 0
    %v1337 = vsel %vm1305, 1, 0
    %v1338 = vsel %vm1306, 1, 0
    %v1339 = vsel %vm1307, 1, 0
    %v1340 = vsel %vm1308, 1, 0
    %v1341 = vsel %vm1309, 1, 0
    %v1342 = vsel %vm1310, 1, 0
    %v1343 = vsel %vm1311, 1, 0
    %v1344 = vsel %vm1312, 1, 0
    %v1345 = vsel %vm1313, 1, 0
    %v1346 = vsel %vm1314, 1, 0
    %v1347 = vsel %vm1315, 1, 0
    %v1348 = vsel %vm1316, 1, 0
    %v1349 = vsel %vm1317, 1, 0
    %v1350 = vsel %vm1318, 1, 0
    %v1351 = vsel %vm1319, 1, 0
    %v1352 = vsel %vm1320, 1, 0
    %v1353 = vsel %vm1321, 1, 0
    %v1354 = vsel %vm1322, 1, 0
    %v1355 = vsel %vm1323, 1, 0
    %v1356 = vsel %vm1324, 1, 0
    %v1357 = vsel %vm1325, 1, 0
    %v1358 = vsel %vm1326, 1, 0
    %v1359 = vsel %vm1327, 1, 0
    %v1360 = vsel %vm1328, 1, 0
    %v1361 = vsel %vm1329, 1, 0
    %1362 = vset.pattern.permute.xlu0 0
    %1363 = vperm.xlu0 %1362, %v1330
    %v1364 = vpop.permute.xlu0 %1363
    %1365 = vset.pattern.permute.xlu0 0
    %1366 = vperm.xlu0 %1365, %v1331
    %v1367 = vpop.permute.xlu0 %1366
    %1368 = vset.pattern.permute.xlu0 0
    %1369 = vperm.xlu0 %1368, %v1332
    %v1370 = vpop.permute.xlu0 %1369
    %1371 = vset.pattern.permute.xlu0 0
    %1372 = vperm.xlu0 %1371, %v1333
    %v1373 = vpop.permute.xlu0 %1372
    %1374 = vset.pattern.permute.xlu0 0
    %1375 = vperm.xlu0 %1374, %v1334
    %v1376 = vpop.permute.xlu0 %1375
    %1377 = vset.pattern.permute.xlu0 0
    %1378 = vperm.xlu0 %1377, %v1335
    %v1379 = vpop.permute.xlu0 %1378
    %1380 = vset.pattern.permute.xlu0 0
    %1381 = vperm.xlu0 %1380, %v1336
    %v1382 = vpop.permute.xlu0 %1381
    %1383 = vset.pattern.permute.xlu0 0
    %1384 = vperm.xlu0 %1383, %v1337
    %v1385 = vpop.permute.xlu0 %1384
    %1386 = vset.pattern.permute.xlu0 0
    %1387 = vperm.xlu0 %1386, %v1338
    %v1388 = vpop.permute.xlu0 %1387
    %1389 = vset.pattern.permute.xlu0 0
    %1390 = vperm.xlu0 %1389, %v1339
    %v1391 = vpop.permute.xlu0 %1390
    %1392 = vset.pattern.permute.xlu0 0
    %1393 = vperm.xlu0 %1392, %v1340
    %v1394 = vpop.permute.xlu0 %1393
    %1395 = vset.pattern.permute.xlu0 0
    %1396 = vperm.xlu0 %1395, %v1341
    %v1397 = vpop.permute.xlu0 %1396
    %1398 = vset.pattern.permute.xlu0 0
    %1399 = vperm.xlu0 %1398, %v1342
    %v1400 = vpop.permute.xlu0 %1399
    %1401 = vset.pattern.permute.xlu0 0
    %1402 = vperm.xlu0 %1401, %v1343
    %v1403 = vpop.permute.xlu0 %1402
    %1404 = vset.pattern.permute.xlu0 0
    %1405 = vperm.xlu0 %1404, %v1344
    %v1406 = vpop.permute.xlu0 %1405
    %1407 = vset.pattern.permute.xlu0 0
    %1408 = vperm.xlu0 %1407, %v1345
    %v1409 = vpop.permute.xlu0 %1408
    %1410 = vset.pattern.permute.xlu0 0
    %1411 = vperm.xlu0 %1410, %v1346
    %v1412 = vpop.permute.xlu0 %1411
    %1413 = vset.pattern.permute.xlu0 0
    %1414 = vperm.xlu0 %1413, %v1347
    %v1415 = vpop.permute.xlu0 %1414
    %1416 = vset.pattern.permute.xlu0 0
    %1417 = vperm.xlu0 %1416, %v1348
    %v1418 = vpop.permute.xlu0 %1417
    %1419 = vset.pattern.permute.xlu0 0
    %1420 = vperm.xlu0 %1419, %v1349
    %v1421 = vpop.permute.xlu0 %1420
    %1422 = vset.pattern.permute.xlu0 0
    %1423 = vperm.xlu0 %1422, %v1350
    %v1424 = vpop.permute.xlu0 %1423
    %1425 = vset.pattern.permute.xlu0 0
    %1426 = vperm.xlu0 %1425, %v1351
    %v1427 = vpop.permute.xlu0 %1426
    %1428 = vset.pattern.permute.xlu0 0
    %1429 = vperm.xlu0 %1428, %v1352
    %v1430 = vpop.permute.xlu0 %1429
    %1431 = vset.pattern.permute.xlu0 0
    %1432 = vperm.xlu0 %1431, %v1353
    %v1433 = vpop.permute.xlu0 %1432
    %1434 = vset.pattern.permute.xlu0 0
    %1435 = vperm.xlu0 %1434, %v1354
    %v1436 = vpop.permute.xlu0 %1435
    %1437 = vset.pattern.permute.xlu0 0
    %1438 = vperm.xlu0 %1437, %v1355
    %v1439 = vpop.permute.xlu0 %1438
    %1440 = vset.pattern.permute.xlu0 0
    %1441 = vperm.xlu0 %1440, %v1356
    %v1442 = vpop.permute.xlu0 %1441
    %1443 = vset.pattern.permute.xlu0 0
    %1444 = vperm.xlu0 %1443, %v1357
    %v1445 = vpop.permute.xlu0 %1444
    %1446 = vset.pattern.permute.xlu0 0
    %1447 = vperm.xlu0 %1446, %v1358
    %v1448 = vpop.permute.xlu0 %1447
    %1449 = vset.pattern.permute.xlu0 0
    %1450 = vperm.xlu0 %1449, %v1359
    %v1451 = vpop.permute.xlu0 %1450
    %1452 = vset.pattern.permute.xlu0 0
    %1453 = vperm.xlu0 %1452, %v1360
    %v1454 = vpop.permute.xlu0 %1453
    %1455 = vset.pattern.permute.xlu0 0
    %1456 = vperm.xlu0 %1455, %v1361
    %v1457 = vpop.permute.xlu0 %1456
    %vm1458 = vcmp.eq.s32.totalorder %v1364, 1
    %vm1459 = vcmp.eq.s32.totalorder %v1367, 1
    %vm1460 = vcmp.eq.s32.totalorder %v1370, 1
    %vm1461 = vcmp.eq.s32.totalorder %v1373, 1
    %vm1462 = vcmp.eq.s32.totalorder %v1376, 1
    %vm1463 = vcmp.eq.s32.totalorder %v1379, 1
    %vm1464 = vcmp.eq.s32.totalorder %v1382, 1
    %vm1465 = vcmp.eq.s32.totalorder %v1385, 1
    %vm1466 = vcmp.eq.s32.totalorder %v1388, 1
    %vm1467 = vcmp.eq.s32.totalorder %v1391, 1
    %vm1468 = vcmp.eq.s32.totalorder %v1394, 1
    %vm1469 = vcmp.eq.s32.totalorder %v1397, 1
    %vm1470 = vcmp.eq.s32.totalorder %v1400, 1
    %vm1471 = vcmp.eq.s32.totalorder %v1403, 1
    %vm1472 = vcmp.eq.s32.totalorder %v1406, 1
    %vm1473 = vcmp.eq.s32.totalorder %v1409, 1
    %vm1474 = vcmp.eq.s32.totalorder %v1412, 1
    %vm1475 = vcmp.eq.s32.totalorder %v1415, 1
    %vm1476 = vcmp.eq.s32.totalorder %v1418, 1
    %vm1477 = vcmp.eq.s32.totalorder %v1421, 1
    %vm1478 = vcmp.eq.s32.totalorder %v1424, 1
    %vm1479 = vcmp.eq.s32.totalorder %v1427, 1
    %vm1480 = vcmp.eq.s32.totalorder %v1430, 1
    %vm1481 = vcmp.eq.s32.totalorder %v1433, 1
    %vm1482 = vcmp.eq.s32.totalorder %v1436, 1
    %vm1483 = vcmp.eq.s32.totalorder %v1439, 1
    %vm1484 = vcmp.eq.s32.totalorder %v1442, 1
    %vm1485 = vcmp.eq.s32.totalorder %v1445, 1
    %vm1486 = vcmp.eq.s32.totalorder %v1448, 1
    %vm1487 = vcmp.eq.s32.totalorder %v1451, 1
    %vm1488 = vcmp.eq.s32.totalorder %v1454, 1
    %vm1489 = vcmp.eq.s32.totalorder %v1457, 1
    %v1490 = vsel %vm1458, %v1185, -1e+30
    %v1491 = vsel %vm1459, %v1186, -1e+30
    %v1492 = vsel %vm1460, %v1187, -1e+30
    %v1493 = vsel %vm1461, %v1188, -1e+30
    %v1494 = vsel %vm1462, %v1189, -1e+30
    %v1495 = vsel %vm1463, %v1190, -1e+30
    %v1496 = vsel %vm1464, %v1191, -1e+30
    %v1497 = vsel %vm1465, %v1192, -1e+30
    %v1498 = vsel %vm1466, %v1193, -1e+30
    %v1499 = vsel %vm1467, %v1194, -1e+30
    %v1500 = vsel %vm1468, %v1195, -1e+30
    %v1501 = vsel %vm1469, %v1196, -1e+30
    %v1502 = vsel %vm1470, %v1197, -1e+30
    %v1503 = vsel %vm1471, %v1198, -1e+30
    %v1504 = vsel %vm1472, %v1199, -1e+30
    %v1505 = vsel %vm1473, %v1200, -1e+30
    %v1506 = vsel %vm1474, %v1201, -1e+30
    %v1507 = vsel %vm1475, %v1202, -1e+30
    %v1508 = vsel %vm1476, %v1203, -1e+30
    %v1509 = vsel %vm1477, %v1204, -1e+30
    %v1510 = vsel %vm1478, %v1205, -1e+30
    %v1511 = vsel %vm1479, %v1206, -1e+30
    %v1512 = vsel %vm1480, %v1207, -1e+30
    %v1513 = vsel %vm1481, %v1208, -1e+30
    %v1514 = vsel %vm1482, %v1209, -1e+30
    %v1515 = vsel %vm1483, %v1210, -1e+30
    %v1516 = vsel %vm1484, %v1211, -1e+30
    %v1517 = vsel %vm1485, %v1212, -1e+30
    %v1518 = vsel %vm1486, %v1213, -1e+30
    %v1519 = vsel %vm1487, %v1214, -1e+30
    %v1520 = vsel %vm1488, %v1215, -1e+30
    %v1521 = vsel %vm1489, %v1216, -1e+30
    %v1522 = vmax.f32 %v1490, %v1491
    %v1523 = vmax.f32 %v1522, %v1492
    %v1524 = vmax.f32 %v1523, %v1493
    %v1525 = vrot.slane %v1524, 4
    %v1526 = vmax.f32 %v1524, %v1525
    %v1527 = vrot.slane %v1526, 2
    %v1528 = vmax.f32 %v1526, %v1527
    %v1529 = vrot.slane %v1528, 1
    %v1530 = vmax.f32 %v1528, %v1529
    %v1531 = vmax.f32 %v1494, %v1495
    %v1532 = vmax.f32 %v1531, %v1496
    %v1533 = vmax.f32 %v1532, %v1497
    %v1534 = vrot.slane %v1533, 4
    %v1535 = vmax.f32 %v1533, %v1534
    %v1536 = vrot.slane %v1535, 2
    %v1537 = vmax.f32 %v1535, %v1536
    %v1538 = vrot.slane %v1537, 1
    %v1539 = vmax.f32 %v1537, %v1538
    %v1540 = vmax.f32 %v1498, %v1499
    %v1541 = vmax.f32 %v1540, %v1500
    %v1542 = vmax.f32 %v1541, %v1501
    %v1543 = vrot.slane %v1542, 4
    %v1544 = vmax.f32 %v1542, %v1543
    %v1545 = vrot.slane %v1544, 2
    %v1546 = vmax.f32 %v1544, %v1545
    %v1547 = vrot.slane %v1546, 1
    %v1548 = vmax.f32 %v1546, %v1547
    %v1549 = vmax.f32 %v1502, %v1503
    %v1550 = vmax.f32 %v1549, %v1504
    %v1551 = vmax.f32 %v1550, %v1505
    %v1552 = vrot.slane %v1551, 4
    %v1553 = vmax.f32 %v1551, %v1552
    %v1554 = vrot.slane %v1553, 2
    %v1555 = vmax.f32 %v1553, %v1554
    %v1556 = vrot.slane %v1555, 1
    %v1557 = vmax.f32 %v1555, %v1556
    %v1558 = vmax.f32 %v1506, %v1507
    %v1559 = vmax.f32 %v1558, %v1508
    %v1560 = vmax.f32 %v1559, %v1509
    %v1561 = vrot.slane %v1560, 4
    %v1562 = vmax.f32 %v1560, %v1561
    %v1563 = vrot.slane %v1562, 2
    %v1564 = vmax.f32 %v1562, %v1563
    %v1565 = vrot.slane %v1564, 1
    %v1566 = vmax.f32 %v1564, %v1565
    %v1567 = vmax.f32 %v1510, %v1511
    %v1568 = vmax.f32 %v1567, %v1512
    %v1569 = vmax.f32 %v1568, %v1513
    %v1570 = vrot.slane %v1569, 4
    %v1571 = vmax.f32 %v1569, %v1570
    %v1572 = vrot.slane %v1571, 2
    %v1573 = vmax.f32 %v1571, %v1572
    %v1574 = vrot.slane %v1573, 1
    %v1575 = vmax.f32 %v1573, %v1574
    %v1576 = vmax.f32 %v1514, %v1515
    %v1577 = vmax.f32 %v1576, %v1516
    %v1578 = vmax.f32 %v1577, %v1517
    %v1579 = vrot.slane %v1578, 4
    %v1580 = vmax.f32 %v1578, %v1579
    %v1581 = vrot.slane %v1580, 2
    %v1582 = vmax.f32 %v1580, %v1581
    %v1583 = vrot.slane %v1582, 1
    %v1584 = vmax.f32 %v1582, %v1583
    %v1585 = vmax.f32 %v1518, %v1519
    %v1586 = vmax.f32 %v1585, %v1520
    %v1587 = vmax.f32 %v1586, %v1521
    %v1588 = vrot.slane %v1587, 4
    %v1589 = vmax.f32 %v1587, %v1588
    %v1590 = vrot.slane %v1589, 2
    %v1591 = vmax.f32 %v1589, %v1590
    %v1592 = vrot.slane %v1591, 1
    %v1593 = vmax.f32 %v1591, %v1592
    %vm1594 = vcmp.ge.s32.totalorder %v1218, %v1237
    %vm1595 = vcmp.ge.s32.totalorder %v1219, %v1237
    %vm1596 = vcmp.ge.s32.totalorder %v1220, %v1237
    %vm1597 = vcmp.ge.s32.totalorder %v1221, %v1237
    %vm1598 = vcmp.ge.s32.totalorder %v1218, %v1241
    %vm1599 = vcmp.ge.s32.totalorder %v1219, %v1241
    %vm1600 = vcmp.ge.s32.totalorder %v1220, %v1241
    %vm1601 = vcmp.ge.s32.totalorder %v1221, %v1241
    %vm1602 = vcmp.ge.s32.totalorder %v1218, %v1245
    %vm1603 = vcmp.ge.s32.totalorder %v1219, %v1245
    %vm1604 = vcmp.ge.s32.totalorder %v1220, %v1245
    %vm1605 = vcmp.ge.s32.totalorder %v1221, %v1245
    %vm1606 = vcmp.ge.s32.totalorder %v1218, %v1249
    %vm1607 = vcmp.ge.s32.totalorder %v1219, %v1249
    %vm1608 = vcmp.ge.s32.totalorder %v1220, %v1249
    %vm1609 = vcmp.ge.s32.totalorder %v1221, %v1249
    %vm1610 = vcmp.ge.s32.totalorder %v1218, %v1253
    %vm1611 = vcmp.ge.s32.totalorder %v1219, %v1253
    %vm1612 = vcmp.ge.s32.totalorder %v1220, %v1253
    %vm1613 = vcmp.ge.s32.totalorder %v1221, %v1253
    %vm1614 = vcmp.ge.s32.totalorder %v1218, %v1257
    %vm1615 = vcmp.ge.s32.totalorder %v1219, %v1257
    %vm1616 = vcmp.ge.s32.totalorder %v1220, %v1257
    %vm1617 = vcmp.ge.s32.totalorder %v1221, %v1257
    %vm1618 = vcmp.ge.s32.totalorder %v1218, %v1261
    %vm1619 = vcmp.ge.s32.totalorder %v1219, %v1261
    %vm1620 = vcmp.ge.s32.totalorder %v1220, %v1261
    %vm1621 = vcmp.ge.s32.totalorder %v1221, %v1261
    %vm1622 = vcmp.ge.s32.totalorder %v1218, %v1265
    %vm1623 = vcmp.ge.s32.totalorder %v1219, %v1265
    %vm1624 = vcmp.ge.s32.totalorder %v1220, %v1265
    %vm1625 = vcmp.ge.s32.totalorder %v1221, %v1265
    %v1626 = vsel %vm1266, 1, 0
    %v1627 = vsel %vm1267, 1, 0
    %v1628 = vsel %vm1268, 1, 0
    %v1629 = vsel %vm1269, 1, 0
    %v1630 = vsel %vm1270, 1, 0
    %v1631 = vsel %vm1271, 1, 0
    %v1632 = vsel %vm1272, 1, 0
    %v1633 = vsel %vm1273, 1, 0
    %v1634 = vsel %vm1274, 1, 0
    %v1635 = vsel %vm1275, 1, 0
    %v1636 = vsel %vm1276, 1, 0
    %v1637 = vsel %vm1277, 1, 0
    %v1638 = vsel %vm1278, 1, 0
    %v1639 = vsel %vm1279, 1, 0
    %v1640 = vsel %vm1280, 1, 0
    %v1641 = vsel %vm1281, 1, 0
    %v1642 = vsel %vm1282, 1, 0
    %v1643 = vsel %vm1283, 1, 0
    %v1644 = vsel %vm1284, 1, 0
    %v1645 = vsel %vm1285, 1, 0
    %v1646 = vsel %vm1286, 1, 0
    %v1647 = vsel %vm1287, 1, 0
    %v1648 = vsel %vm1288, 1, 0
    %v1649 = vsel %vm1289, 1, 0
    %v1650 = vsel %vm1290, 1, 0
    %v1651 = vsel %vm1291, 1, 0
    %v1652 = vsel %vm1292, 1, 0
    %v1653 = vsel %vm1293, 1, 0
    %v1654 = vsel %vm1294, 1, 0
    %v1655 = vsel %vm1295, 1, 0
    %v1656 = vsel %vm1296, 1, 0
    %v1657 = vsel %vm1297, 1, 0
    %1658 = vrot.lane.b32.xlu0 %v1626, 127
    %v1659 = vpop.permute.xlu0 %1658
    %1660 = vrot.lane.b32.xlu0 %v1627, 127
    %v1661 = vpop.permute.xlu0 %1660
    %1662 = vrot.lane.b32.xlu0 %v1628, 127
    %v1663 = vpop.permute.xlu0 %1662
    %1664 = vrot.lane.b32.xlu0 %v1629, 127
    %v1665 = vpop.permute.xlu0 %1664
    %1666 = vrot.lane.b32.xlu0 %v1630, 127
    %v1667 = vpop.permute.xlu0 %1666
    %1668 = vrot.lane.b32.xlu0 %v1631, 127
    %v1669 = vpop.permute.xlu0 %1668
    %1670 = vrot.lane.b32.xlu0 %v1632, 127
    %v1671 = vpop.permute.xlu0 %1670
    %1672 = vrot.lane.b32.xlu0 %v1633, 127
    %v1673 = vpop.permute.xlu0 %1672
    %1674 = vrot.lane.b32.xlu0 %v1634, 127
    %v1675 = vpop.permute.xlu0 %1674
    %1676 = vrot.lane.b32.xlu0 %v1635, 127
    %v1677 = vpop.permute.xlu0 %1676
    %1678 = vrot.lane.b32.xlu0 %v1636, 127
    %v1679 = vpop.permute.xlu0 %1678
    %1680 = vrot.lane.b32.xlu0 %v1637, 127
    %v1681 = vpop.permute.xlu0 %1680
    %1682 = vrot.lane.b32.xlu0 %v1638, 127
    %v1683 = vpop.permute.xlu0 %1682
    %1684 = vrot.lane.b32.xlu0 %v1639, 127
    %v1685 = vpop.permute.xlu0 %1684
    %1686 = vrot.lane.b32.xlu0 %v1640, 127
    %v1687 = vpop.permute.xlu0 %1686
    %1688 = vrot.lane.b32.xlu0 %v1641, 127
    %v1689 = vpop.permute.xlu0 %1688
    %1690 = vrot.lane.b32.xlu0 %v1642, 127
    %v1691 = vpop.permute.xlu0 %1690
    %1692 = vrot.lane.b32.xlu0 %v1643, 127
    %v1693 = vpop.permute.xlu0 %1692
    %1694 = vrot.lane.b32.xlu0 %v1644, 127
    %v1695 = vpop.permute.xlu0 %1694
    %1696 = vrot.lane.b32.xlu0 %v1645, 127
    %v1697 = vpop.permute.xlu0 %1696
    %1698 = vrot.lane.b32.xlu0 %v1646, 127
    %v1699 = vpop.permute.xlu0 %1698
    %1700 = vrot.lane.b32.xlu0 %v1647, 127
    %v1701 = vpop.permute.xlu0 %1700
    %1702 = vrot.lane.b32.xlu0 %v1648, 127
    %v1703 = vpop.permute.xlu0 %1702
    %1704 = vrot.lane.b32.xlu0 %v1649, 127
    %v1705 = vpop.permute.xlu0 %1704
    %1706 = vrot.lane.b32.xlu0 %v1650, 127
    %v1707 = vpop.permute.xlu0 %1706
    %1708 = vrot.lane.b32.xlu0 %v1651, 127
    %v1709 = vpop.permute.xlu0 %1708
    %1710 = vrot.lane.b32.xlu0 %v1652, 127
    %v1711 = vpop.permute.xlu0 %1710
    %1712 = vrot.lane.b32.xlu0 %v1653, 127
    %v1713 = vpop.permute.xlu0 %1712
    %1714 = vrot.lane.b32.xlu0 %v1654, 127
    %v1715 = vpop.permute.xlu0 %1714
    %1716 = vrot.lane.b32.xlu0 %v1655, 127
    %v1717 = vpop.permute.xlu0 %1716
    %1718 = vrot.lane.b32.xlu0 %v1656, 127
    %v1719 = vpop.permute.xlu0 %1718
    %1720 = vrot.lane.b32.xlu0 %v1657, 127
    %v1721 = vpop.permute.xlu0 %1720
    %vm1722 = vcmp.ne.s32.totalorder %v1659, 0
    %vm1723 = vcmp.ne.s32.totalorder %v1661, 0
    %vm1724 = vcmp.ne.s32.totalorder %v1663, 0
    %vm1725 = vcmp.ne.s32.totalorder %v1665, 0
    %vm1726 = vcmp.ne.s32.totalorder %v1667, 0
    %vm1727 = vcmp.ne.s32.totalorder %v1669, 0
    %vm1728 = vcmp.ne.s32.totalorder %v1671, 0
    %vm1729 = vcmp.ne.s32.totalorder %v1673, 0
    %vm1730 = vcmp.ne.s32.totalorder %v1675, 0
    %vm1731 = vcmp.ne.s32.totalorder %v1677, 0
    %vm1732 = vcmp.ne.s32.totalorder %v1679, 0
    %vm1733 = vcmp.ne.s32.totalorder %v1681, 0
    %vm1734 = vcmp.ne.s32.totalorder %v1683, 0
    %vm1735 = vcmp.ne.s32.totalorder %v1685, 0
    %vm1736 = vcmp.ne.s32.totalorder %v1687, 0
    %vm1737 = vcmp.ne.s32.totalorder %v1689, 0
    %vm1738 = vcmp.ne.s32.totalorder %v1691, 0
    %vm1739 = vcmp.ne.s32.totalorder %v1693, 0
    %vm1740 = vcmp.ne.s32.totalorder %v1695, 0
    %vm1741 = vcmp.ne.s32.totalorder %v1697, 0
    %vm1742 = vcmp.ne.s32.totalorder %v1699, 0
    %vm1743 = vcmp.ne.s32.totalorder %v1701, 0
    %vm1744 = vcmp.ne.s32.totalorder %v1703, 0
    %vm1745 = vcmp.ne.s32.totalorder %v1705, 0
    %vm1746 = vcmp.ne.s32.totalorder %v1707, 0
    %vm1747 = vcmp.ne.s32.totalorder %v1709, 0
    %vm1748 = vcmp.ne.s32.totalorder %v1711, 0
    %vm1749 = vcmp.ne.s32.totalorder %v1713, 0
    %vm1750 = vcmp.ne.s32.totalorder %v1715, 0
    %vm1751 = vcmp.ne.s32.totalorder %v1717, 0
    %vm1752 = vcmp.ne.s32.totalorder %v1719, 0
    %vm1753 = vcmp.ne.s32.totalorder %v1721, 0
    %vm1754 = vmand %vm1594, %vm1722
    %vm1755 = vmand %vm1595, %vm1723
    %vm1756 = vmand %vm1596, %vm1724
    %vm1757 = vmand %vm1597, %vm1725
    %vm1758 = vmand %vm1598, %vm1726
    %vm1759 = vmand %vm1599, %vm1727
    %vm1760 = vmand %vm1600, %vm1728
    %vm1761 = vmand %vm1601, %vm1729
    %vm1762 = vmand %vm1602, %vm1730
    %vm1763 = vmand %vm1603, %vm1731
    %vm1764 = vmand %vm1604, %vm1732
    %vm1765 = vmand %vm1605, %vm1733
    %vm1766 = vmand %vm1606, %vm1734
    %vm1767 = vmand %vm1607, %vm1735
    %vm1768 = vmand %vm1608, %vm1736
    %vm1769 = vmand %vm1609, %vm1737
    %vm1770 = vmand %vm1610, %vm1738
    %vm1771 = vmand %vm1611, %vm1739
    %vm1772 = vmand %vm1612, %vm1740
    %vm1773 = vmand %vm1613, %vm1741
    %vm1774 = vmand %vm1614, %vm1742
    %vm1775 = vmand %vm1615, %vm1743
    %vm1776 = vmand %vm1616, %vm1744
    %vm1777 = vmand %vm1617, %vm1745
    %vm1778 = vmand %vm1618, %vm1746
    %vm1779 = vmand %vm1619, %vm1747
    %vm1780 = vmand %vm1620, %vm1748
    %vm1781 = vmand %vm1621, %vm1749
    %vm1782 = vmand %vm1622, %vm1750
    %vm1783 = vmand %vm1623, %vm1751
    %vm1784 = vmand %vm1624, %vm1752
    %vm1785 = vmand %vm1625, %vm1753
    %vm1786 = vmand %vm1754, %vm1230
    %vm1787 = vmand %vm1755, %vm1231
    %vm1788 = vmand %vm1756, %vm1232
    %vm1789 = vmand %vm1757, %vm1233
    %vm1790 = vmand %vm1758, %vm1230
    %vm1791 = vmand %vm1759, %vm1231
    %vm1792 = vmand %vm1760, %vm1232
    %vm1793 = vmand %vm1761, %vm1233
    %vm1794 = vmand %vm1762, %vm1230
    %vm1795 = vmand %vm1763, %vm1231
    %vm1796 = vmand %vm1764, %vm1232
    %vm1797 = vmand %vm1765, %vm1233
    %vm1798 = vmand %vm1766, %vm1230
    %vm1799 = vmand %vm1767, %vm1231
    %vm1800 = vmand %vm1768, %vm1232
    %vm1801 = vmand %vm1769, %vm1233
    %vm1802 = vmand %vm1770, %vm1230
    %vm1803 = vmand %vm1771, %vm1231
    %vm1804 = vmand %vm1772, %vm1232
    %vm1805 = vmand %vm1773, %vm1233
    %vm1806 = vmand %vm1774, %vm1230
    %vm1807 = vmand %vm1775, %vm1231
    %vm1808 = vmand %vm1776, %vm1232
    %vm1809 = vmand %vm1777, %vm1233
    %vm1810 = vmand %vm1778, %vm1230
    %vm1811 = vmand %vm1779, %vm1231
    %vm1812 = vmand %vm1780, %vm1232
    %vm1813 = vmand %vm1781, %vm1233
    %vm1814 = vmand %vm1782, %vm1230
    %vm1815 = vmand %vm1783, %vm1231
    %vm1816 = vmand %vm1784, %vm1232
    %vm1817 = vmand %vm1785, %vm1233
    %v1818 = vsel %vm1786, 1, 0
    %v1819 = vsel %vm1787, 1, 0
    %v1820 = vsel %vm1788, 1, 0
    %v1821 = vsel %vm1789, 1, 0
    %v1822 = vsel %vm1790, 1, 0
    %v1823 = vsel %vm1791, 1, 0
    %v1824 = vsel %vm1792, 1, 0
    %v1825 = vsel %vm1793, 1, 0
    %v1826 = vsel %vm1794, 1, 0
    %v1827 = vsel %vm1795, 1, 0
    %v1828 = vsel %vm1796, 1, 0
    %v1829 = vsel %vm1797, 1, 0
    %v1830 = vsel %vm1798, 1, 0
    %v1831 = vsel %vm1799, 1, 0
    %v1832 = vsel %vm1800, 1, 0
    %v1833 = vsel %vm1801, 1, 0
    %v1834 = vsel %vm1802, 1, 0
    %v1835 = vsel %vm1803, 1, 0
    %v1836 = vsel %vm1804, 1, 0
    %v1837 = vsel %vm1805, 1, 0
    %v1838 = vsel %vm1806, 1, 0
    %v1839 = vsel %vm1807, 1, 0
    %v1840 = vsel %vm1808, 1, 0
    %v1841 = vsel %vm1809, 1, 0
    %v1842 = vsel %vm1810, 1, 0
    %v1843 = vsel %vm1811, 1, 0
    %v1844 = vsel %vm1812, 1, 0
    %v1845 = vsel %vm1813, 1, 0
    %v1846 = vsel %vm1814, 1, 0
    %v1847 = vsel %vm1815, 1, 0
    %v1848 = vsel %vm1816, 1, 0
    %v1849 = vsel %vm1817, 1, 0
    %1850 = vset.pattern.permute.xlu0 0
    %1851 = vperm.xlu0 %1850, %v1818
    %v1852 = vpop.permute.xlu0 %1851
    %1853 = vset.pattern.permute.xlu0 0
    %1854 = vperm.xlu0 %1853, %v1819
    %v1855 = vpop.permute.xlu0 %1854
    %1856 = vset.pattern.permute.xlu0 0
    %1857 = vperm.xlu0 %1856, %v1820
    %v1858 = vpop.permute.xlu0 %1857
    %1859 = vset.pattern.permute.xlu0 0
    %1860 = vperm.xlu0 %1859, %v1821
    %v1861 = vpop.permute.xlu0 %1860
    %1862 = vset.pattern.permute.xlu0 0
    %1863 = vperm.xlu0 %1862, %v1822
    %v1864 = vpop.permute.xlu0 %1863
    %1865 = vset.pattern.permute.xlu0 0
    %1866 = vperm.xlu0 %1865, %v1823
    %v1867 = vpop.permute.xlu0 %1866
    %1868 = vset.pattern.permute.xlu0 0
    %1869 = vperm.xlu0 %1868, %v1824
    %v1870 = vpop.permute.xlu0 %1869
    %1871 = vset.pattern.permute.xlu0 0
    %1872 = vperm.xlu0 %1871, %v1825
    %v1873 = vpop.permute.xlu0 %1872
    %1874 = vset.pattern.permute.xlu0 0
    %1875 = vperm.xlu0 %1874, %v1826
    %v1876 = vpop.permute.xlu0 %1875
    %1877 = vset.pattern.permute.xlu0 0
    %1878 = vperm.xlu0 %1877, %v1827
    %v1879 = vpop.permute.xlu0 %1878
    %1880 = vset.pattern.permute.xlu0 0
    %1881 = vperm.xlu0 %1880, %v1828
    %v1882 = vpop.permute.xlu0 %1881
    %1883 = vset.pattern.permute.xlu0 0
    %1884 = vperm.xlu0 %1883, %v1829
    %v1885 = vpop.permute.xlu0 %1884
    %1886 = vset.pattern.permute.xlu0 0
    %1887 = vperm.xlu0 %1886, %v1830
    %v1888 = vpop.permute.xlu0 %1887
    %1889 = vset.pattern.permute.xlu0 0
    %1890 = vperm.xlu0 %1889, %v1831
    %v1891 = vpop.permute.xlu0 %1890
    %1892 = vset.pattern.permute.xlu0 0
    %1893 = vperm.xlu0 %1892, %v1832
    %v1894 = vpop.permute.xlu0 %1893
    %1895 = vset.pattern.permute.xlu0 0
    %1896 = vperm.xlu0 %1895, %v1833
    %v1897 = vpop.permute.xlu0 %1896
    %1898 = vset.pattern.permute.xlu0 0
    %1899 = vperm.xlu0 %1898, %v1834
    %v1900 = vpop.permute.xlu0 %1899
    %1901 = vset.pattern.permute.xlu0 0
    %1902 = vperm.xlu0 %1901, %v1835
    %v1903 = vpop.permute.xlu0 %1902
    %1904 = vset.pattern.permute.xlu0 0
    %1905 = vperm.xlu0 %1904, %v1836
    %v1906 = vpop.permute.xlu0 %1905
    %1907 = vset.pattern.permute.xlu0 0
    %1908 = vperm.xlu0 %1907, %v1837
    %v1909 = vpop.permute.xlu0 %1908
    %1910 = vset.pattern.permute.xlu0 0
    %1911 = vperm.xlu0 %1910, %v1838
    %v1912 = vpop.permute.xlu0 %1911
    %1913 = vset.pattern.permute.xlu0 0
    %1914 = vperm.xlu0 %1913, %v1839
    %v1915 = vpop.permute.xlu0 %1914
    %1916 = vset.pattern.permute.xlu0 0
    %1917 = vperm.xlu0 %1916, %v1840
    %v1918 = vpop.permute.xlu0 %1917
    %1919 = vset.pattern.permute.xlu0 0
    %1920 = vperm.xlu0 %1919, %v1841
    %v1921 = vpop.permute.xlu0 %1920
    %1922 = vset.pattern.permute.xlu0 0
    %1923 = vperm.xlu0 %1922, %v1842
    %v1924 = vpop.permute.xlu0 %1923
    %1925 = vset.pattern.permute.xlu0 0
    %1926 = vperm.xlu0 %1925, %v1843
    %v1927 = vpop.permute.xlu0 %1926
    %1928 = vset.pattern.permute.xlu0 0
    %1929 = vperm.xlu0 %1928, %v1844
    %v1930 = vpop.permute.xlu0 %1929
    %1931 = vset.pattern.permute.xlu0 0
    %1932 = vperm.xlu0 %1931, %v1845
    %v1933 = vpop.permute.xlu0 %1932
    %1934 = vset.pattern.permute.xlu0 0
    %1935 = vperm.xlu0 %1934, %v1846
    %v1936 = vpop.permute.xlu0 %1935
    %1937 = vset.pattern.permute.xlu0 0
    %1938 = vperm.xlu0 %1937, %v1847
    %v1939 = vpop.permute.xlu0 %1938
    %1940 = vset.pattern.permute.xlu0 0
    %1941 = vperm.xlu0 %1940, %v1848
    %v1942 = vpop.permute.xlu0 %1941
    %1943 = vset.pattern.permute.xlu0 0
    %1944 = vperm.xlu0 %1943, %v1849
    %v1945 = vpop.permute.xlu0 %1944
    %vm1946 = vcmp.eq.s32.totalorder %v1852, 1
    %vm1947 = vcmp.eq.s32.totalorder %v1855, 1
    %vm1948 = vcmp.eq.s32.totalorder %v1858, 1
    %vm1949 = vcmp.eq.s32.totalorder %v1861, 1
    %vm1950 = vcmp.eq.s32.totalorder %v1864, 1
    %vm1951 = vcmp.eq.s32.totalorder %v1867, 1
    %vm1952 = vcmp.eq.s32.totalorder %v1870, 1
    %vm1953 = vcmp.eq.s32.totalorder %v1873, 1
    %vm1954 = vcmp.eq.s32.totalorder %v1876, 1
    %vm1955 = vcmp.eq.s32.totalorder %v1879, 1
    %vm1956 = vcmp.eq.s32.totalorder %v1882, 1
    %vm1957 = vcmp.eq.s32.totalorder %v1885, 1
    %vm1958 = vcmp.eq.s32.totalorder %v1888, 1
    %vm1959 = vcmp.eq.s32.totalorder %v1891, 1
    %vm1960 = vcmp.eq.s32.totalorder %v1894, 1
    %vm1961 = vcmp.eq.s32.totalorder %v1897, 1
    %vm1962 = vcmp.eq.s32.totalorder %v1900, 1
    %vm1963 = vcmp.eq.s32.totalorder %v1903, 1
    %vm1964 = vcmp.eq.s32.totalorder %v1906, 1
    %vm1965 = vcmp.eq.s32.totalorder %v1909, 1
    %vm1966 = vcmp.eq.s32.totalorder %v1912, 1
    %vm1967 = vcmp.eq.s32.totalorder %v1915, 1
    %vm1968 = vcmp.eq.s32.totalorder %v1918, 1
    %vm1969 = vcmp.eq.s32.totalorder %v1921, 1
    %vm1970 = vcmp.eq.s32.totalorder %v1924, 1
    %vm1971 = vcmp.eq.s32.totalorder %v1927, 1
    %vm1972 = vcmp.eq.s32.totalorder %v1930, 1
    %vm1973 = vcmp.eq.s32.totalorder %v1933, 1
    %vm1974 = vcmp.eq.s32.totalorder %v1936, 1
    %vm1975 = vcmp.eq.s32.totalorder %v1939, 1
    %vm1976 = vcmp.eq.s32.totalorder %v1942, 1
    %vm1977 = vcmp.eq.s32.totalorder %v1945, 1
    %v1978 = vsel %vm1946, %v1185, -1e+30
    %v1979 = vsel %vm1947, %v1186, -1e+30
    %v1980 = vsel %vm1948, %v1187, -1e+30
    %v1981 = vsel %vm1949, %v1188, -1e+30
    %v1982 = vsel %vm1950, %v1189, -1e+30
    %v1983 = vsel %vm1951, %v1190, -1e+30
    %v1984 = vsel %vm1952, %v1191, -1e+30
    %v1985 = vsel %vm1953, %v1192, -1e+30
    %v1986 = vsel %vm1954, %v1193, -1e+30
    %v1987 = vsel %vm1955, %v1194, -1e+30
    %v1988 = vsel %vm1956, %v1195, -1e+30
    %v1989 = vsel %vm1957, %v1196, -1e+30
    %v1990 = vsel %vm1958, %v1197, -1e+30
    %v1991 = vsel %vm1959, %v1198, -1e+30
    %v1992 = vsel %vm1960, %v1199, -1e+30
    %v1993 = vsel %vm1961, %v1200, -1e+30
    %v1994 = vsel %vm1962, %v1201, -1e+30
    %v1995 = vsel %vm1963, %v1202, -1e+30
    %v1996 = vsel %vm1964, %v1203, -1e+30
    %v1997 = vsel %vm1965, %v1204, -1e+30
    %v1998 = vsel %vm1966, %v1205, -1e+30
    %v1999 = vsel %vm1967, %v1206, -1e+30
    %v2000 = vsel %vm1968, %v1207, -1e+30
    %v2001 = vsel %vm1969, %v1208, -1e+30
    %v2002 = vsel %vm1970, %v1209, -1e+30
    %v2003 = vsel %vm1971, %v1210, -1e+30
    %v2004 = vsel %vm1972, %v1211, -1e+30
    %v2005 = vsel %vm1973, %v1212, -1e+30
    %v2006 = vsel %vm1974, %v1213, -1e+30
    %v2007 = vsel %vm1975, %v1214, -1e+30
    %v2008 = vsel %vm1976, %v1215, -1e+30
    %v2009 = vsel %vm1977, %v1216, -1e+30
    %v2010 = vmax.f32 %v1978, %v1979
    %v2011 = vmax.f32 %v2010, %v1980
    %v2012 = vmax.f32 %v2011, %v1981
    %v2013 = vrot.slane %v2012, 4
    %v2014 = vmax.f32 %v2012, %v2013
    %v2015 = vrot.slane %v2014, 2
    %v2016 = vmax.f32 %v2014, %v2015
    %v2017 = vrot.slane %v2016, 1
    %v2018 = vmax.f32 %v2016, %v2017
    %v2019 = vmax.f32 %v1982, %v1983
    %v2020 = vmax.f32 %v2019, %v1984
    %v2021 = vmax.f32 %v2020, %v1985
    %v2022 = vrot.slane %v2021, 4
    %v2023 = vmax.f32 %v2021, %v2022
    %v2024 = vrot.slane %v2023, 2
    %v2025 = vmax.f32 %v2023, %v2024
    %v2026 = vrot.slane %v2025, 1
    %v2027 = vmax.f32 %v2025, %v2026
    %v2028 = vmax.f32 %v1986, %v1987
    %v2029 = vmax.f32 %v2028, %v1988
    %v2030 = vmax.f32 %v2029, %v1989
    %v2031 = vrot.slane %v2030, 4
    %v2032 = vmax.f32 %v2030, %v2031
    %v2033 = vrot.slane %v2032, 2
    %v2034 = vmax.f32 %v2032, %v2033
    %v2035 = vrot.slane %v2034, 1
    %v2036 = vmax.f32 %v2034, %v2035
    %v2037 = vmax.f32 %v1990, %v1991
    %v2038 = vmax.f32 %v2037, %v1992
    %v2039 = vmax.f32 %v2038, %v1993
    %v2040 = vrot.slane %v2039, 4
    %v2041 = vmax.f32 %v2039, %v2040
    %v2042 = vrot.slane %v2041, 2
    %v2043 = vmax.f32 %v2041, %v2042
    %v2044 = vrot.slane %v2043, 1
    %v2045 = vmax.f32 %v2043, %v2044
    %v2046 = vmax.f32 %v1994, %v1995
    %v2047 = vmax.f32 %v2046, %v1996
    %v2048 = vmax.f32 %v2047, %v1997
    %v2049 = vrot.slane %v2048, 4
    %v2050 = vmax.f32 %v2048, %v2049
    %v2051 = vrot.slane %v2050, 2
    %v2052 = vmax.f32 %v2050, %v2051
    %v2053 = vrot.slane %v2052, 1
    %v2054 = vmax.f32 %v2052, %v2053
    %v2055 = vmax.f32 %v1998, %v1999
    %v2056 = vmax.f32 %v2055, %v2000
    %v2057 = vmax.f32 %v2056, %v2001
    %v2058 = vrot.slane %v2057, 4
    %v2059 = vmax.f32 %v2057, %v2058
    %v2060 = vrot.slane %v2059, 2
    %v2061 = vmax.f32 %v2059, %v2060
    %v2062 = vrot.slane %v2061, 1
    %v2063 = vmax.f32 %v2061, %v2062
    %v2064 = vmax.f32 %v2002, %v2003
    %v2065 = vmax.f32 %v2064, %v2004
    %v2066 = vmax.f32 %v2065, %v2005
    %v2067 = vrot.slane %v2066, 4
    %v2068 = vmax.f32 %v2066, %v2067
    %v2069 = vrot.slane %v2068, 2
    %v2070 = vmax.f32 %v2068, %v2069
    %v2071 = vrot.slane %v2070, 1
    %v2072 = vmax.f32 %v2070, %v2071
    %v2073 = vmax.f32 %v2006, %v2007
    %v2074 = vmax.f32 %v2073, %v2008
    %v2075 = vmax.f32 %v2074, %v2009
    %v2076 = vrot.slane %v2075, 4
    %v2077 = vmax.f32 %v2075, %v2076
    %v2078 = vrot.slane %v2077, 2
    %v2079 = vmax.f32 %v2077, %v2078
    %v2080 = vrot.slane %v2079, 1
    %v2081 = vmax.f32 %v2079, %v2080
    %vm2082 = vmand %vm1594, %vm1230
    %vm2083 = vmand %vm1595, %vm1231
    %vm2084 = vmand %vm1596, %vm1232
    %vm2085 = vmand %vm1597, %vm1233
    %vm2086 = vmand %vm1598, %vm1230
    %vm2087 = vmand %vm1599, %vm1231
    %vm2088 = vmand %vm1600, %vm1232
    %vm2089 = vmand %vm1601, %vm1233
    %vm2090 = vmand %vm1602, %vm1230
    %vm2091 = vmand %vm1603, %vm1231
    %vm2092 = vmand %vm1604, %vm1232
    %vm2093 = vmand %vm1605, %vm1233
    %vm2094 = vmand %vm1606, %vm1230
    %vm2095 = vmand %vm1607, %vm1231
    %vm2096 = vmand %vm1608, %vm1232
    %vm2097 = vmand %vm1609, %vm1233
    %vm2098 = vmand %vm1610, %vm1230
    %vm2099 = vmand %vm1611, %vm1231
    %vm2100 = vmand %vm1612, %vm1232
    %vm2101 = vmand %vm1613, %vm1233
    %vm2102 = vmand %vm1614, %vm1230
    %vm2103 = vmand %vm1615, %vm1231
    %vm2104 = vmand %vm1616, %vm1232
    %vm2105 = vmand %vm1617, %vm1233
    %vm2106 = vmand %vm1618, %vm1230
    %vm2107 = vmand %vm1619, %vm1231
    %vm2108 = vmand %vm1620, %vm1232
    %vm2109 = vmand %vm1621, %vm1233
    %vm2110 = vmand %vm1622, %vm1230
    %vm2111 = vmand %vm1623, %vm1231
    %vm2112 = vmand %vm1624, %vm1232
    %vm2113 = vmand %vm1625, %vm1233
    %v2114 = vsel %vm2082, 1, 0
    %v2115 = vsel %vm2083, 1, 0
    %v2116 = vsel %vm2084, 1, 0
    %v2117 = vsel %vm2085, 1, 0
    %v2118 = vsel %vm2086, 1, 0
    %v2119 = vsel %vm2087, 1, 0
    %v2120 = vsel %vm2088, 1, 0
    %v2121 = vsel %vm2089, 1, 0
    %v2122 = vsel %vm2090, 1, 0
    %v2123 = vsel %vm2091, 1, 0
    %v2124 = vsel %vm2092, 1, 0
    %v2125 = vsel %vm2093, 1, 0
    %v2126 = vsel %vm2094, 1, 0
    %v2127 = vsel %vm2095, 1, 0
    %v2128 = vsel %vm2096, 1, 0
    %v2129 = vsel %vm2097, 1, 0
    %v2130 = vsel %vm2098, 1, 0
    %v2131 = vsel %vm2099, 1, 0
    %v2132 = vsel %vm2100, 1, 0
    %v2133 = vsel %vm2101, 1, 0
    %v2134 = vsel %vm2102, 1, 0
    %v2135 = vsel %vm2103, 1, 0
    %v2136 = vsel %vm2104, 1, 0
    %v2137 = vsel %vm2105, 1, 0
    %v2138 = vsel %vm2106, 1, 0
    %v2139 = vsel %vm2107, 1, 0
    %v2140 = vsel %vm2108, 1, 0
    %v2141 = vsel %vm2109, 1, 0
    %v2142 = vsel %vm2110, 1, 0
    %v2143 = vsel %vm2111, 1, 0
    %v2144 = vsel %vm2112, 1, 0
    %v2145 = vsel %vm2113, 1, 0
    %2146 = vset.pattern.permute.xlu0 1
    %2147 = vperm.xlu0 %2146, %v2114
    %v2148 = vpop.permute.xlu0 %2147
    %2149 = vset.pattern.permute.xlu0 1
    %2150 = vperm.xlu0 %2149, %v2115
    %v2151 = vpop.permute.xlu0 %2150
    %2152 = vset.pattern.permute.xlu0 1
    %2153 = vperm.xlu0 %2152, %v2116
    %v2154 = vpop.permute.xlu0 %2153
    %2155 = vset.pattern.permute.xlu0 1
    %2156 = vperm.xlu0 %2155, %v2117
    %v2157 = vpop.permute.xlu0 %2156
    %2158 = vset.pattern.permute.xlu0 1
    %2159 = vperm.xlu0 %2158, %v2118
    %v2160 = vpop.permute.xlu0 %2159
    %2161 = vset.pattern.permute.xlu0 1
    %2162 = vperm.xlu0 %2161, %v2119
    %v2163 = vpop.permute.xlu0 %2162
    %2164 = vset.pattern.permute.xlu0 1
    %2165 = vperm.xlu0 %2164, %v2120
    %v2166 = vpop.permute.xlu0 %2165
    %2167 = vset.pattern.permute.xlu0 1
    %2168 = vperm.xlu0 %2167, %v2121
    %v2169 = vpop.permute.xlu0 %2168
    %2170 = vset.pattern.permute.xlu0 1
    %2171 = vperm.xlu0 %2170, %v2122
    %v2172 = vpop.permute.xlu0 %2171
    %2173 = vset.pattern.permute.xlu0 1
    %2174 = vperm.xlu0 %2173, %v2123
    %v2175 = vpop.permute.xlu0 %2174
    %2176 = vset.pattern.permute.xlu0 1
    %2177 = vperm.xlu0 %2176, %v2124
    %v2178 = vpop.permute.xlu0 %2177
    %2179 = vset.pattern.permute.xlu0 1
    %2180 = vperm.xlu0 %2179, %v2125
    %v2181 = vpop.permute.xlu0 %2180
    %2182 = vset.pattern.permute.xlu0 1
    %2183 = vperm.xlu0 %2182, %v2126
    %v2184 = vpop.permute.xlu0 %2183
    %2185 = vset.pattern.permute.xlu0 1
    %2186 = vperm.xlu0 %2185, %v2127
    %v2187 = vpop.permute.xlu0 %2186
    %2188 = vset.pattern.permute.xlu0 1
    %2189 = vperm.xlu0 %2188, %v2128
    %v2190 = vpop.permute.xlu0 %2189
    %2191 = vset.pattern.permute.xlu0 1
    %2192 = vperm.xlu0 %2191, %v2129
    %v2193 = vpop.permute.xlu0 %2192
    %2194 = vset.pattern.permute.xlu0 1
    %2195 = vperm.xlu0 %2194, %v2130
    %v2196 = vpop.permute.xlu0 %2195
    %2197 = vset.pattern.permute.xlu0 1
    %2198 = vperm.xlu0 %2197, %v2131
    %v2199 = vpop.permute.xlu0 %2198
    %2200 = vset.pattern.permute.xlu0 1
    %2201 = vperm.xlu0 %2200, %v2132
    %v2202 = vpop.permute.xlu0 %2201
    %2203 = vset.pattern.permute.xlu0 1
    %2204 = vperm.xlu0 %2203, %v2133
    %v2205 = vpop.permute.xlu0 %2204
    %2206 = vset.pattern.permute.xlu0 1
    %2207 = vperm.xlu0 %2206, %v2134
    %v2208 = vpop.permute.xlu0 %2207
    %2209 = vset.pattern.permute.xlu0 1
    %2210 = vperm.xlu0 %2209, %v2135
    %v2211 = vpop.permute.xlu0 %2210
    %2212 = vset.pattern.permute.xlu0 1
    %2213 = vperm.xlu0 %2212, %v2136
    %v2214 = vpop.permute.xlu0 %2213
    %2215 = vset.pattern.permute.xlu0 1
    %2216 = vperm.xlu0 %2215, %v2137
    %v2217 = vpop.permute.xlu0 %2216
    %2218 = vset.pattern.permute.xlu0 1
    %2219 = vperm.xlu0 %2218, %v2138
    %v2220 = vpop.permute.xlu0 %2219
    %2221 = vset.pattern.permute.xlu0 1
    %2222 = vperm.xlu0 %2221, %v2139
    %v2223 = vpop.permute.xlu0 %2222
    %2224 = vset.pattern.permute.xlu0 1
    %2225 = vperm.xlu0 %2224, %v2140
    %v2226 = vpop.permute.xlu0 %2225
    %2227 = vset.pattern.permute.xlu0 1
    %2228 = vperm.xlu0 %2227, %v2141
    %v2229 = vpop.permute.xlu0 %2228
    %2230 = vset.pattern.permute.xlu0 1
    %2231 = vperm.xlu0 %2230, %v2142
    %v2232 = vpop.permute.xlu0 %2231
    %2233 = vset.pattern.permute.xlu0 1
    %2234 = vperm.xlu0 %2233, %v2143
    %v2235 = vpop.permute.xlu0 %2234
    %2236 = vset.pattern.permute.xlu0 1
    %2237 = vperm.xlu0 %2236, %v2144
    %v2238 = vpop.permute.xlu0 %2237
    %2239 = vset.pattern.permute.xlu0 1
    %2240 = vperm.xlu0 %2239, %v2145
    %v2241 = vpop.permute.xlu0 %2240
    %vm2242 = vcmp.eq.s32.totalorder %v2148, 1
    %vm2243 = vcmp.eq.s32.totalorder %v2151, 1
    %vm2244 = vcmp.eq.s32.totalorder %v2154, 1
    %vm2245 = vcmp.eq.s32.totalorder %v2157, 1
    %vm2246 = vcmp.eq.s32.totalorder %v2160, 1
    %vm2247 = vcmp.eq.s32.totalorder %v2163, 1
    %vm2248 = vcmp.eq.s32.totalorder %v2166, 1
    %vm2249 = vcmp.eq.s32.totalorder %v2169, 1
    %vm2250 = vcmp.eq.s32.totalorder %v2172, 1
    %vm2251 = vcmp.eq.s32.totalorder %v2175, 1
    %vm2252 = vcmp.eq.s32.totalorder %v2178, 1
    %vm2253 = vcmp.eq.s32.totalorder %v2181, 1
    %vm2254 = vcmp.eq.s32.totalorder %v2184, 1
    %vm2255 = vcmp.eq.s32.totalorder %v2187, 1
    %vm2256 = vcmp.eq.s32.totalorder %v2190, 1
    %vm2257 = vcmp.eq.s32.totalorder %v2193, 1
    %vm2258 = vcmp.eq.s32.totalorder %v2196, 1
    %vm2259 = vcmp.eq.s32.totalorder %v2199, 1
    %vm2260 = vcmp.eq.s32.totalorder %v2202, 1
    %vm2261 = vcmp.eq.s32.totalorder %v2205, 1
    %vm2262 = vcmp.eq.s32.totalorder %v2208, 1
    %vm2263 = vcmp.eq.s32.totalorder %v2211, 1
    %vm2264 = vcmp.eq.s32.totalorder %v2214, 1
    %vm2265 = vcmp.eq.s32.totalorder %v2217, 1
    %vm2266 = vcmp.eq.s32.totalorder %v2220, 1
    %vm2267 = vcmp.eq.s32.totalorder %v2223, 1
    %vm2268 = vcmp.eq.s32.totalorder %v2226, 1
    %vm2269 = vcmp.eq.s32.totalorder %v2229, 1
    %vm2270 = vcmp.eq.s32.totalorder %v2232, 1
    %vm2271 = vcmp.eq.s32.totalorder %v2235, 1
    %vm2272 = vcmp.eq.s32.totalorder %v2238, 1
    %vm2273 = vcmp.eq.s32.totalorder %v2241, 1
    %v2274 = vsel %vm2242, %v1185, -1e+30
    %v2275 = vsel %vm2243, %v1186, -1e+30
    %v2276 = vsel %vm2244, %v1187, -1e+30
    %v2277 = vsel %vm2245, %v1188, -1e+30
    %v2278 = vsel %vm2246, %v1189, -1e+30
    %v2279 = vsel %vm2247, %v1190, -1e+30
    %v2280 = vsel %vm2248, %v1191, -1e+30
    %v2281 = vsel %vm2249, %v1192, -1e+30
    %v2282 = vsel %vm2250, %v1193, -1e+30
    %v2283 = vsel %vm2251, %v1194, -1e+30
    %v2284 = vsel %vm2252, %v1195, -1e+30
    %v2285 = vsel %vm2253, %v1196, -1e+30
    %v2286 = vsel %vm2254, %v1197, -1e+30
    %v2287 = vsel %vm2255, %v1198, -1e+30
    %v2288 = vsel %vm2256, %v1199, -1e+30
    %v2289 = vsel %vm2257, %v1200, -1e+30
    %v2290 = vsel %vm2258, %v1201, -1e+30
    %v2291 = vsel %vm2259, %v1202, -1e+30
    %v2292 = vsel %vm2260, %v1203, -1e+30
    %v2293 = vsel %vm2261, %v1204, -1e+30
    %v2294 = vsel %vm2262, %v1205, -1e+30
    %v2295 = vsel %vm2263, %v1206, -1e+30
    %v2296 = vsel %vm2264, %v1207, -1e+30
    %v2297 = vsel %vm2265, %v1208, -1e+30
    %v2298 = vsel %vm2266, %v1209, -1e+30
    %v2299 = vsel %vm2267, %v1210, -1e+30
    %v2300 = vsel %vm2268, %v1211, -1e+30
    %v2301 = vsel %vm2269, %v1212, -1e+30
    %v2302 = vsel %vm2270, %v1213, -1e+30
    %v2303 = vsel %vm2271, %v1214, -1e+30
    %v2304 = vsel %vm2272, %v1215, -1e+30
    %v2305 = vsel %vm2273, %v1216, -1e+30
    %v2306 = vmax.f32 %v2274, %v2275
    %v2307 = vmax.f32 %v2306, %v2276
    %v2308 = vmax.f32 %v2307, %v2277
    %v2309 = vrot.slane %v2308, 4
    %v2310 = vmax.f32 %v2308, %v2309
    %v2311 = vrot.slane %v2310, 2
    %v2312 = vmax.f32 %v2310, %v2311
    %v2313 = vrot.slane %v2312, 1
    %v2314 = vmax.f32 %v2312, %v2313
    %v2315 = vmax.f32 %v2278, %v2279
    %v2316 = vmax.f32 %v2315, %v2280
    %v2317 = vmax.f32 %v2316, %v2281
    %v2318 = vrot.slane %v2317, 4
    %v2319 = vmax.f32 %v2317, %v2318
    %v2320 = vrot.slane %v2319, 2
    %v2321 = vmax.f32 %v2319, %v2320
    %v2322 = vrot.slane %v2321, 1
    %v2323 = vmax.f32 %v2321, %v2322
    %v2324 = vmax.f32 %v2282, %v2283
    %v2325 = vmax.f32 %v2324, %v2284
    %v2326 = vmax.f32 %v2325, %v2285
    %v2327 = vrot.slane %v2326, 4
    %v2328 = vmax.f32 %v2326, %v2327
    %v2329 = vrot.slane %v2328, 2
    %v2330 = vmax.f32 %v2328, %v2329
    %v2331 = vrot.slane %v2330, 1
    %v2332 = vmax.f32 %v2330, %v2331
    %v2333 = vmax.f32 %v2286, %v2287
    %v2334 = vmax.f32 %v2333, %v2288
    %v2335 = vmax.f32 %v2334, %v2289
    %v2336 = vrot.slane %v2335, 4
    %v2337 = vmax.f32 %v2335, %v2336
    %v2338 = vrot.slane %v2337, 2
    %v2339 = vmax.f32 %v2337, %v2338
    %v2340 = vrot.slane %v2339, 1
    %v2341 = vmax.f32 %v2339, %v2340
    %v2342 = vmax.f32 %v2290, %v2291
    %v2343 = vmax.f32 %v2342, %v2292
    %v2344 = vmax.f32 %v2343, %v2293
    %v2345 = vrot.slane %v2344, 4
    %v2346 = vmax.f32 %v2344, %v2345
    %v2347 = vrot.slane %v2346, 2
    %v2348 = vmax.f32 %v2346, %v2347
    %v2349 = vrot.slane %v2348, 1
    %v2350 = vmax.f32 %v2348, %v2349
    %v2351 = vmax.f32 %v2294, %v2295
    %v2352 = vmax.f32 %v2351, %v2296
    %v2353 = vmax.f32 %v2352, %v2297
    %v2354 = vrot.slane %v2353, 4
    %v2355 = vmax.f32 %v2353, %v2354
    %v2356 = vrot.slane %v2355, 2
    %v2357 = vmax.f32 %v2355, %v2356
    %v2358 = vrot.slane %v2357, 1
    %v2359 = vmax.f32 %v2357, %v2358
    %v2360 = vmax.f32 %v2298, %v2299
    %v2361 = vmax.f32 %v2360, %v2300
    %v2362 = vmax.f32 %v2361, %v2301
    %v2363 = vrot.slane %v2362, 4
    %v2364 = vmax.f32 %v2362, %v2363
    %v2365 = vrot.slane %v2364, 2
    %v2366 = vmax.f32 %v2364, %v2365
    %v2367 = vrot.slane %v2366, 1
    %v2368 = vmax.f32 %v2366, %v2367
    %v2369 = vmax.f32 %v2302, %v2303
    %v2370 = vmax.f32 %v2369, %v2304
    %v2371 = vmax.f32 %v2370, %v2305
    %v2372 = vrot.slane %v2371, 4
    %v2373 = vmax.f32 %v2371, %v2372
    %v2374 = vrot.slane %v2373, 2
    %v2375 = vmax.f32 %v2373, %v2374
    %v2376 = vrot.slane %v2375, 1
    %v2377 = vmax.f32 %v2375, %v2376
    %vm2386 = vcmask 1041409
    %v2387 = vsel %vm2386, %v1539, %v1530
    %vm2388 = vcmask 1042434
    %v2389 = vsel %vm2388, %v1548, %v2387
    %vm2390 = vcmask 1043459
    %v2391 = vsel %vm2390, %v1557, %v2389
    %vm2392 = vcmask 1044484
    %v2393 = vsel %vm2392, %v1566, %v2391
    %vm2394 = vcmask 1045509
    %v2395 = vsel %vm2394, %v1575, %v2393
    %vm2396 = vcmask 1046534
    %v2397 = vsel %vm2396, %v1584, %v2395
    %vm2398 = vcmask 1047559
    %v2399 = vsel %vm2398, %v1593, %v2397
    %v2409 = vsel %vm2386, %v2027, %v2018
    %v2410 = vsel %vm2388, %v2036, %v2409
    %v2411 = vsel %vm2390, %v2045, %v2410
    %v2412 = vsel %vm2392, %v2054, %v2411
    %v2413 = vsel %vm2394, %v2063, %v2412
    %v2414 = vsel %vm2396, %v2072, %v2413
    %v2415 = vsel %vm2398, %v2081, %v2414
    %v2425 = vsel %vm2386, %v2323, %v2314
    %v2426 = vsel %vm2388, %v2332, %v2425
    %v2427 = vsel %vm2390, %v2341, %v2426
    %v2428 = vsel %vm2392, %v2350, %v2427
    %v2429 = vsel %vm2394, %v2359, %v2428
    %v2430 = vsel %vm2396, %v2368, %v2429
    %v2431 = vsel %vm2398, %v2377, %v2430
    %2433 = vst [vmem:[#allocation8] sm:$0xff] %v2399
    %2434 = vst [vmem:[#allocation8 + $0x8] sm:$0xff] %v2415
    %2435 = vst [vmem:[#allocation8 + $0x10] sm:$0xff] %v2431
    %v2436 = vld [vmem:[#allocation7] sm:$0xff]
    %v2437 = vld [vmem:[#allocation7 + $0x8] sm:$0xff]
    %v2438 = vld [vmem:[#allocation7 + $0x10] sm:$0xff]
    %v2439 = vld [vmem:[#allocation7 + $0x18] sm:$0xff]
    %v2440 = vld [vmem:[#allocation7 + $0x20] sm:$0xff]
    %v2441 = vld [vmem:[#allocation7 + $0x28] sm:$0xff]
    %v2442 = vld [vmem:[#allocation7 + $0x30] sm:$0xff]
    %v2443 = vld [vmem:[#allocation7 + $0x38] sm:$0xff]
    %v2444 = vld [vmem:[#allocation7 + $0x40] sm:$0xff]
    %v2445 = vld [vmem:[#allocation7 + $0x48] sm:$0xff]
    %v2446 = vld [vmem:[#allocation7 + $0x50] sm:$0xff]
    %v2447 = vld [vmem:[#allocation7 + $0x58] sm:$0xff]
    %v2448 = vld [vmem:[#allocation7 + $0x60] sm:$0xff]
    %v2449 = vld [vmem:[#allocation7 + $0x68] sm:$0xff]
    %v2450 = vld [vmem:[#allocation7 + $0x70] sm:$0xff]
    %v2451 = vld [vmem:[#allocation7 + $0x78] sm:$0xff]
    %v2452 = vld [vmem:[#allocation7 + $0x80] sm:$0xff]
    %v2453 = vld [vmem:[#allocation7 + $0x88] sm:$0xff]
    %v2454 = vld [vmem:[#allocation7 + $0x90] sm:$0xff]
    %v2455 = vld [vmem:[#allocation7 + $0x98] sm:$0xff]
    %v2456 = vld [vmem:[#allocation7 + $0xa0] sm:$0xff]
    %v2457 = vld [vmem:[#allocation7 + $0xa8] sm:$0xff]
    %v2458 = vld [vmem:[#allocation7 + $0xb0] sm:$0xff]
    %v2459 = vld [vmem:[#allocation7 + $0xb8] sm:$0xff]
    %v2460 = vld [vmem:[#allocation7 + $0xc0] sm:$0xff]
    %v2461 = vld [vmem:[#allocation7 + $0xc8] sm:$0xff]
    %v2462 = vld [vmem:[#allocation7 + $0xd0] sm:$0xff]
    %v2463 = vld [vmem:[#allocation7 + $0xd8] sm:$0xff]
    %v2464 = vld [vmem:[#allocation7 + $0xe0] sm:$0xff]
    %v2465 = vld [vmem:[#allocation7 + $0xe8] sm:$0xff]
    %v2466 = vld [vmem:[#allocation7 + $0xf0] sm:$0xff]
    %v2467 = vld [vmem:[#allocation7 + $0xf8] sm:$0xff]
    %v2468 = vld [vmem:[#allocation7 + $0x100] sm:$0xff]
    %v2469 = vld [vmem:[#allocation7 + $0x108] sm:$0xff]
    %v2470 = vld [vmem:[#allocation7 + $0x110] sm:$0xff]
    %v2471 = vld [vmem:[#allocation7 + $0x118] sm:$0xff]
    %v2472 = vld [vmem:[#allocation7 + $0x120] sm:$0xff]
    %v2473 = vld [vmem:[#allocation7 + $0x128] sm:$0xff]
    %v2474 = vld [vmem:[#allocation7 + $0x130] sm:$0xff]
    %v2475 = vld [vmem:[#allocation7 + $0x138] sm:$0xff]
    %v2476 = vld [vmem:[#allocation7 + $0x140] sm:$0xff]
    %v2477 = vld [vmem:[#allocation7 + $0x148] sm:$0xff]
    %v2478 = vld [vmem:[#allocation7 + $0x150] sm:$0xff]
    %v2479 = vld [vmem:[#allocation7 + $0x158] sm:$0xff]
    %v2480 = vld [vmem:[#allocation7 + $0x160] sm:$0xff]
    %v2481 = vld [vmem:[#allocation7 + $0x168] sm:$0xff]
    %v2482 = vld [vmem:[#allocation7 + $0x170] sm:$0xff]
    %v2483 = vld [vmem:[#allocation7 + $0x178] sm:$0xff]
    %v2484 = vld [vmem:[#allocation7 + $0x180] sm:$0xff]
    %v2485 = vld [vmem:[#allocation7 + $0x188] sm:$0xff]
    %v2486 = vld [vmem:[#allocation7 + $0x190] sm:$0xff]
    %v2487 = vld [vmem:[#allocation7 + $0x198] sm:$0xff]
    %v2488 = vld [vmem:[#allocation7 + $0x1a0] sm:$0xff]
    %v2489 = vld [vmem:[#allocation7 + $0x1a8] sm:$0xff]
    %v2490 = vld [vmem:[#allocation7 + $0x1b0] sm:$0xff]
    %v2491 = vld [vmem:[#allocation7 + $0x1b8] sm:$0xff]
    %v2492 = vld [vmem:[#allocation7 + $0x1c0] sm:$0xff]
    %v2493 = vld [vmem:[#allocation7 + $0x1c8] sm:$0xff]
    %v2494 = vld [vmem:[#allocation7 + $0x1d0] sm:$0xff]
    %v2495 = vld [vmem:[#allocation7 + $0x1d8] sm:$0xff]
    %v2496 = vld [vmem:[#allocation7 + $0x1e0] sm:$0xff]
    %v2497 = vld [vmem:[#allocation7 + $0x1e8] sm:$0xff]
    %v2498 = vld [vmem:[#allocation7 + $0x1f0] sm:$0xff]
    %v2499 = vld [vmem:[#allocation7 + $0x1f8] sm:$0xff]
    %v2500 = vld [vmem:[#allocation7 + $0x200] sm:$0xff]
    %v2501 = vld [vmem:[#allocation7 + $0x208] sm:$0xff]
    %v2502 = vld [vmem:[#allocation7 + $0x210] sm:$0xff]
    %v2503 = vld [vmem:[#allocation7 + $0x218] sm:$0xff]
    %v2504 = vld [vmem:[#allocation7 + $0x220] sm:$0xff]
    %v2505 = vld [vmem:[#allocation7 + $0x228] sm:$0xff]
    %v2506 = vld [vmem:[#allocation7 + $0x230] sm:$0xff]
    %v2507 = vld [vmem:[#allocation7 + $0x238] sm:$0xff]
    %v2508 = vld [vmem:[#allocation7 + $0x240] sm:$0xff]
    %v2509 = vld [vmem:[#allocation7 + $0x248] sm:$0xff]
    %v2510 = vld [vmem:[#allocation7 + $0x250] sm:$0xff]
    %v2511 = vld [vmem:[#allocation7 + $0x258] sm:$0xff]
    %v2512 = vld [vmem:[#allocation7 + $0x260] sm:$0xff]
    %v2513 = vld [vmem:[#allocation7 + $0x268] sm:$0xff]
    %v2514 = vld [vmem:[#allocation7 + $0x270] sm:$0xff]
    %v2515 = vld [vmem:[#allocation7 + $0x278] sm:$0xff]
    %v2516 = vld [vmem:[#allocation7 + $0x280] sm:$0xff]
    %v2517 = vld [vmem:[#allocation7 + $0x288] sm:$0xff]
    %v2518 = vld [vmem:[#allocation7 + $0x290] sm:$0xff]
    %v2519 = vld [vmem:[#allocation7 + $0x298] sm:$0xff]
    %v2520 = vld [vmem:[#allocation7 + $0x2a0] sm:$0xff]
    %v2521 = vld [vmem:[#allocation7 + $0x2a8] sm:$0xff]
    %v2522 = vld [vmem:[#allocation7 + $0x2b0] sm:$0xff]
    %v2523 = vld [vmem:[#allocation7 + $0x2b8] sm:$0xff]
    %v2524 = vld [vmem:[#allocation7 + $0x2c0] sm:$0xff]
    %v2525 = vld [vmem:[#allocation7 + $0x2c8] sm:$0xff]
    %v2526 = vld [vmem:[#allocation7 + $0x2d0] sm:$0xff]
    %v2527 = vld [vmem:[#allocation7 + $0x2d8] sm:$0xff]
    %v2528 = vld [vmem:[#allocation7 + $0x2e0] sm:$0xff]
    %v2529 = vld [vmem:[#allocation7 + $0x2e8] sm:$0xff]
    %v2530 = vld [vmem:[#allocation7 + $0x2f0] sm:$0xff]
    %v2531 = vld [vmem:[#allocation7 + $0x2f8] sm:$0xff]
    %2532 = vmatprep.subr.mxu0 %v2437
    %2533 = vmatpush1.msra.mxu0 %v2436
    %2534 = vmatprep.subr.mxu0 %v2439
    %2535 = vmatpush1.msra.mxu0 %v2438
    %2536 = vmatprep.subr.mxu0 %v2441
    %2537 = vmatpush1.msra.mxu0 %v2440
    %2538 = vmatprep.subr.mxu0 %v2443
    %2539 = vmatpush1.msra.mxu0 %v2442
    %2540 = vmatprep.subr.mxu0 %v2445
    %2541 = vmatpush1.msra.mxu0 %v2444
    %2542 = vmatprep.subr.mxu0 %v2447
    %2543 = vmatpush1.msra.mxu0 %v2446
    %2544 = vmatprep.subr.mxu0 %v2449
    %2545 = vmatpush1.msra.mxu0 %v2448
    %2546 = vmatprep.subr.mxu0 %v2451
    %2547 = vmatpush1.msra.mxu0 %v2450
    %2548 = vmatprep.subr.mxu0 %v2453
    %2549 = vmatpush1.msra.mxu0 %v2452
    %2550 = vmatprep.subr.mxu0 %v2455
    %2551 = vmatpush1.msra.mxu0 %v2454
    %2552 = vmatprep.subr.mxu0 %v2457
    %2553 = vmatpush1.msra.mxu0 %v2456
    %2554 = vmatprep.subr.mxu0 %v2459
    %2555 = vmatpush1.msra.mxu0 %v2458
    %2556 = vmatprep.subr.mxu0 %v2461
    %2557 = vmatpush1.msra.mxu0 %v2460
    %2558 = vmatprep.subr.mxu0 %v2463
    %2559 = vmatpush1.msra.mxu0 %v2462
    %2560 = vmatprep.subr.mxu0 %v2465
    %2561 = vmatpush1.msra.mxu0 %v2464
    %2562 = vmatprep.subr.mxu0 %v2467
    %2563 = vmatpush1.msra.mxu0 %v2466
    %2564 = vmatprep.subr.mxu0 %v2469
    %2565 = vmatpush1.msra.mxu0 %v2468
    %2566 = vmatprep.subr.mxu0 %v2471
    %2567 = vmatpush1.msra.mxu0 %v2470
    %2568 = vmatprep.subr.mxu0 %v2473
    %2569 = vmatpush1.msra.mxu0 %v2472
    %2570 = vmatprep.subr.mxu0 %v2475
    %2571 = vmatpush1.msra.mxu0 %v2474
    %2572 = vmatprep.subr.mxu0 %v2477
    %2573 = vmatpush1.msra.mxu0 %v2476
    %2574 = vmatprep.subr.mxu0 %v2479
    %2575 = vmatpush1.msra.mxu0 %v2478
    %2576 = vmatprep.subr.mxu0 %v2481
    %2577 = vmatpush1.msra.mxu0 %v2480
    %2578 = vmatprep.subr.mxu0 %v2483
    %2579 = vmatpush1.msra.mxu0 %v2482
    %2580 = vmatprep.subr.mxu0 %v2485
    %2581 = vmatpush1.msra.mxu0 %v2484
    %2582 = vmatprep.subr.mxu0 %v2487
    %2583 = vmatpush1.msra.mxu0 %v2486
    %2584 = vmatprep.subr.mxu0 %v2489
    %2585 = vmatpush1.msra.mxu0 %v2488
    %2586 = vmatprep.subr.mxu0 %v2491
    %2587 = vmatpush1.msra.mxu0 %v2490
    %2588 = vmatprep.subr.mxu0 %v2493
    %2589 = vmatpush1.msra.mxu0 %v2492
    %2590 = vmatprep.subr.mxu0 %v2495
    %2591 = vmatpush1.msra.mxu0 %v2494
    %2592 = vmatprep.subr.mxu0 %v2497
    %2593 = vmatpush1.msra.mxu0 %v2496
    %2594 = vmatprep.subr.mxu0 %v2499
    %2595 = vmatpush1.msra.mxu0 %v2498
    %2596 = vmatprep.mubr.f32.mxu0 %v2415
    %2597 = vmatmul.mubr.f32.gmra.mrb[0].mxu0 %v2399
    %v2598 = vpop.f32.mrb[0].mxu0
    %v2599 = vadd.f32 0.0, %v2598
    %v2600 = vpop.f32.mrb[0].mxu0
    %v2601 = vadd.f32 0.0, %v2600
    %2602 = vdwg.mxu0
    %2603 = vmatprep.subr.mxu0 %v2501
    %2604 = vmatpush1.msra.mxu0 %v2500
    %2605 = vmatprep.subr.mxu0 %v2503
    %2606 = vmatpush1.msra.mxu0 %v2502
    %2607 = vmatprep.subr.mxu0 %v2505
    %2608 = vmatpush1.msra.mxu0 %v2504
    %2609 = vmatprep.subr.mxu0 %v2507
    %2610 = vmatpush1.msra.mxu0 %v2506
    %2611 = vmatprep.subr.mxu0 %v2509
    %2612 = vmatpush1.msra.mxu0 %v2508
    %2613 = vmatprep.subr.mxu0 %v2511
    %2614 = vmatpush1.msra.mxu0 %v2510
    %2615 = vmatprep.subr.mxu0 %v2513
    %2616 = vmatpush1.msra.mxu0 %v2512
    %2617 = vmatprep.subr.mxu0 %v2515
    %2618 = vmatpush1.msra.mxu0 %v2514
    %2619 = vmatprep.subr.mxu0 %v2517
    %2620 = vmatpush1.msra.mxu0 %v2516
    %2621 = vmatprep.subr.mxu0 %v2519
    %2622 = vmatpush1.msra.mxu0 %v2518
    %2623 = vmatprep.subr.mxu0 %v2521
    %2624 = vmatpush1.msra.mxu0 %v2520
    %2625 = vmatprep.subr.mxu0 %v2523
    %2626 = vmatpush1.msra.mxu0 %v2522
    %2627 = vmatprep.subr.mxu0 %v2525
    %2628 = vmatpush1.msra.mxu0 %v2524
    %2629 = vmatprep.subr.mxu0 %v2527
    %2630 = vmatpush1.msra.mxu0 %v2526
    %2631 = vmatprep.subr.mxu0 %v2529
    %2632 = vmatpush1.msra.mxu0 %v2528
    %2633 = vmatprep.subr.mxu0 %v2531
    %2634 = vmatpush1.msra.mxu0 %v2530
    %2635 = vmatprep.subr.mxu0 0.0
    %2636 = vmatpush1.msra.mxu0 0.0
    %2637 = vmatprep.subr.mxu0 0.0
    %2638 = vmatpush1.msra.mxu0 0.0
    %2639 = vmatprep.subr.mxu0 0.0
    %2640 = vmatpush1.msra.mxu0 0.0
    %2641 = vmatprep.subr.mxu0 0.0
    %2642 = vmatpush1.msra.mxu0 0.0
    %2643 = vmatprep.subr.mxu0 0.0
    %2644 = vmatpush1.msra.mxu0 0.0
    %2645 = vmatprep.subr.mxu0 0.0
    %2646 = vmatpush1.msra.mxu0 0.0
    %2647 = vmatprep.subr.mxu0 0.0
    %2648 = vmatpush1.msra.mxu0 0.0
    %2649 = vmatprep.subr.mxu0 0.0
    %2650 = vmatpush1.msra.mxu0 0.0
    %2651 = vmatprep.subr.mxu0 0.0
    %2652 = vmatpush1.msra.mxu0 0.0
    %2653 = vmatprep.subr.mxu0 0.0
    %2654 = vmatpush1.msra.mxu0 0.0
    %2655 = vmatprep.subr.mxu0 0.0
    %2656 = vmatpush1.msra.mxu0 0.0
    %2657 = vmatprep.subr.mxu0 0.0
    %2658 = vmatpush1.msra.mxu0 0.0
    %2659 = vmatprep.subr.mxu0 0.0
    %2660 = vmatpush1.msra.mxu0 0.0
    %2661 = vmatprep.subr.mxu0 0.0
    %2662 = vmatpush1.msra.mxu0 0.0
    %2663 = vmatprep.subr.mxu0 0.0
    %2664 = vmatpush1.msra.mxu0 0.0
    %2665 = vmatprep.subr.mxu0 0.0
    %2666 = vmatpush1.msra.mxu0 0.0
    %2667 = vmatprep.mubr.f32.mxu0 0.0
    %2668 = vmatmul.mubr.f32.gmra.mrb[0].mxu0 %v2431
    %v2669 = vpop.f32.mrb[0].mxu0
    %v2670 = vadd.f32 %v2599, %v2669
    %v2671 = vpop.f32.mrb[0].mxu0
    %v2672 = vadd.f32 %v2601, %v2671
    %2673 = vdwg.mxu0
    %v2674 = vld [vmem:[%s5] sm:$0x1]
    %v2676 = vlaneseq
    %v2677 = vshrl.u32 %v2676, 7
    %v2678 = vsub.s32 0, %v2677
    %v2679 = vrot.slane %v2674, %v2678
    %v2681 = vadd.f32 %v2670, %v2679
    %2682 = vst [vmem:[#allocation9] sm:$0xff] %v2681
    %v2683 = vmul.f32 %v2399, %v2399
    %v2684 = vmul.f32 %v2415, %v2415
    %v2685 = vmul.f32 %v2431, %v2431
    %v2686 = vadd.f32 %v2683, %v2684
    %v2687 = vadd.f32 %v2686, %v2685
    %2688 = vadd.xlane.f32.xlu0 %v2687
    %v2689 = vpop.xlane.xlu0 %2688
    %v2690 = vmax.f32 %v2689, 1e-16
    %v2691 = vrsqrt.pop %v2690
    %v2692 = vmul.f32 %v2672, %v2691
    %2693 = vst [vmem:[#allocation11] sm:$0xff] %v2692
    // Predicated region
    $region38: #{tpu_custom_call.1} parent=1 // pred_check
      _
    $region39: #{tpu_custom_call.1} parent=1 // pred_check_branch
      %2695 = sbr.rel (0) target = $region41
    $region40: #{tpu_custom_call.1} parent=1 // pred_region
      %s2697 = ssub.s32 384, 384
      %2698 = vsyncadd [#allocation4], %s2697
      %s2700 = sshll.u32 [#allocation8], 4
      %s2701 = int_to_ptr.vmem [resolvable:$true] %s2700
      %2703 = dma.vmem_to_hbm [thread:$0]  %s2701, 384, %s6, [#allocation4]
    $region41: #{tpu_custom_call.1} parent=1 // pred_fallthru
      _
    // Predicated region
    $region42: #{tpu_custom_call.1} parent=1 // pred_check
      _
    $region43: #{tpu_custom_call.1} parent=1 // pred_check_branch
      %2705 = sbr.rel (0) target = $region45
    $region44: #{tpu_custom_call.1} parent=1 // pred_region
      %s2707 = ssub.s32 128, 128
      %2708 = vsyncadd [#allocation10], %s2707
      %s2710 = sshll.u32 [#allocation9], 4
      %s2711 = int_to_ptr.vmem [resolvable:$true] %s2710
      %2713 = dma.vmem_to_hbm [thread:$0]  %s2711, 128, %s7, [#allocation10]
    $region45: #{tpu_custom_call.1} parent=1 // pred_fallthru
      _
    // Predicated region
    $region46: #{tpu_custom_call.1} parent=1 // pred_check
      _
    $region47: #{tpu_custom_call.1} parent=1 // pred_check_branch
      %2715 = sbr.rel (0) target = $region49
    $region48: #{tpu_custom_call.1} parent=1 // pred_region
      %s2717 = ssub.s32 128, 128
      %2718 = vsyncadd [#allocation10], %s2717
      %s2720 = sshll.u32 [#allocation11], 4
      %s2721 = int_to_ptr.vmem [resolvable:$true] %s2720
      %2723 = dma.vmem_to_hbm [thread:$0]  %s2721, 128, %s8, [#allocation10]
    $region49: #{tpu_custom_call.1} parent=1 // pred_fallthru
      _
    // Predicated region
    $region50: #{tpu_custom_call.1} parent=1 // pred_check
      _
    $region51: #{tpu_custom_call.1} parent=1 // pred_check_branch
      %2725 = sbr.rel (0) target = $region53
    $region52: #{tpu_custom_call.1} parent=1 // pred_region
      %2726 = dma.done [#allocation4], 384
    $region53: #{tpu_custom_call.1} parent=1 // pred_fallthru
      _
    // Predicated region
    $region54: #{tpu_custom_call.1} parent=1 // pred_check
      _
    $region55: #{tpu_custom_call.1} parent=1 // pred_check_branch
      %2728 = sbr.rel (0) target = $region57
    $region56: #{tpu_custom_call.1} parent=1 // pred_region
      %2729 = dma.done [#allocation10], 128
    $region57: #{tpu_custom_call.1} parent=1 // pred_fallthru
      _
    // Predicated region
    $region58: #{tpu_custom_call.1} parent=1 // pred_check
      _
    $region59: #{tpu_custom_call.1} parent=1 // pred_check_branch
      %2731 = sbr.rel (0) target = $region61
    $region60: #{tpu_custom_call.1} parent=1 // pred_region
      %2732 = dma.done [#allocation10], 128
    $region61: #{tpu_custom_call.1} parent=1 // pred_fallthru
      _
    %2733 = vsyncpa [#allocation3], 1
    %2734 = vsyncpa [#allocation6], 1
    %2735 = vsyncpa [#allocation4], 1
    %2736 = vsyncpa [#allocation10], 1

</llo_original>
